<compile_context>
chip_gen: v7x
topology: tpu7x:2x2x1
jax: 0.10.0
libtpu: 0.0.40
codegen_flags: <defaults>
</compile_context>

<pallas_src>
import functools
import numpy as np
import jax
import jax.numpy as jnp
from jax import lax
from jax.experimental import pallas as pl
from jax.experimental.pallas import tpu as pltpu

LANE = 128  # pad every feature / gate dimension to a full 128-lane vreg width


# ------------------------------ tiling helper -------------------------------

def _node_tile(n, target):
    """Largest power-of-two-ish tile <= target that divides n (or n itself)."""
    if n <= target:
        return n
    tm = target
    while tm >= 8:
        if n % tm == 0:
            return tm
        tm //= 2
    return n  # fall back to a single full block (always a legal block shape)


# ----------------------------- Pallas kernels ------------------------------

def _linear_chain_kernel(*refs, n_layers, relu_flags, has_mask):
    """refs = (x[, mask], w0, b0, w1, b1, ..., o): chained dot+bias(+relu)."""
    pos = 0
    x_ref = refs[pos]; pos += 1
    m_ref = None
    if has_mask:
        m_ref = refs[pos]; pos += 1
    o_ref = refs[-1]

    h = x_ref[...].astype(jnp.float32)
    if has_mask:
        h = h * m_ref[...]          # fused neighbor mask (zero padded timesteps)
    for l in range(n_layers):
        w_ref = refs[pos]; b_ref = refs[pos + 1]; pos += 2
        h = jnp.dot(h.astype(w_ref.dtype), w_ref[...],
                    preferred_element_type=jnp.float32)
        h = h + b_ref[...]
        if relu_flags[l]:
            h = jnp.maximum(h, 0.0)
    o_ref[...] = h.astype(o_ref.dtype)


def pallas_linear_chain(x, layers, relu_flags, mask=None,
                        out_dtype=jnp.float32, row_tile=512):
    """Fused chain of (x @ W + b [+ relu]) layers, tiled over the row axis."""
    n, k0 = x.shape
    out_dim = layers[-1][0].shape[1]
    tm = _node_tile(n, row_tile)
    # TODO(synk): on v7x (64 MiB VMEM) cap tm so 2*(tm*k0 + tm*out_dim)*4B plus
    #             resident weights stays within the scoped VMEM budget.
    in_specs = [pl.BlockSpec((tm, k0), lambda i: (i, 0))]
    args = [x]
    if mask is not None:
        in_specs.append(pl.BlockSpec((tm, 1), lambda i: (i, 0)))
        args.append(mask)
    for w, b in layers:
        ki, ko = w.shape
        in_specs.append(pl.BlockSpec((ki, ko), lambda i: (0, 0)))   # resident
        in_specs.append(pl.BlockSpec((1, ko), lambda i: (0, 0)))    # resident
        args.append(w)
        args.append(b.reshape(1, -1))
    kernel = functools.partial(_linear_chain_kernel,
                               n_layers=len(layers),
                               relu_flags=tuple(relu_flags),
                               has_mask=mask is not None)
    return pl.pallas_call(
        kernel,
        out_shape=jax.ShapeDtypeStruct((n, out_dim), out_dtype),
        grid=(n // tm,),
        in_specs=in_specs,
        out_specs=pl.BlockSpec((tm, out_dim), lambda i: (i, 0)),
        compiler_params=pltpu.CompilerParams(
            dimension_semantics=("parallel",)),
    )(*args)


def _sage_out_kernel(*refs, n_tail, tail_relu):
    """out = relu(agg @ W_l + x @ W_r + b), then optional fused MLP tail."""
    agg_ref, x_ref, wl_ref, wr_ref, b_ref = refs[:5]
    o_ref = refs[-1]
    # two K=128 dots into one f32 accumulator (replaces the old concat trick)
    h = jnp.dot(agg_ref[...].astype(wl_ref.dtype), wl_ref[...],
                preferred_element_type=jnp.float32)
    h = h + jnp.dot(x_ref[...].astype(wr_ref.dtype), wr_ref[...],
                    preferred_element_type=jnp.float32)
    h = jnp.maximum(h + b_ref[...], 0.0)
    for l in range(n_tail):
        w_ref = refs[5 + 2 * l]
        tb_ref = refs[6 + 2 * l]
        h = jnp.dot(h.astype(w_ref.dtype), w_ref[...],
                    preferred_element_type=jnp.float32) + tb_ref[...]
        if tail_relu[l]:
            h = jnp.maximum(h, 0.0)
    o_ref[...] = h.astype(o_ref.dtype)


def pallas_sage_out(agg, x_pad, w_l, w_r, b, tail_layers=(), tail_relu=(),
                    row_tile=512):
    n, hdim = agg.shape
    out_dim = tail_layers[-1][0].shape[1] if tail_layers else w_l.shape[1]
    tm = _node_tile(n, row_tile)
    in_specs = [pl.BlockSpec((tm, hdim), lambda i: (i, 0)),
                pl.BlockSpec((tm, x_pad.shape[1]), lambda i: (i, 0)),
                pl.BlockSpec(w_l.shape, lambda i: (0, 0)),
                pl.BlockSpec(w_r.shape, lambda i: (0, 0)),
                pl.BlockSpec((1, w_l.shape[1]), lambda i: (0, 0))]
    args = [agg, x_pad, w_l, w_r, b.reshape(1, -1)]
    for w, bb in tail_layers:
        in_specs.append(pl.BlockSpec(w.shape, lambda i: (0, 0)))
        in_specs.append(pl.BlockSpec((1, w.shape[1]), lambda i: (0, 0)))
        args.append(w)
        args.append(bb.reshape(1, -1))
    kernel = functools.partial(_sage_out_kernel, n_tail=len(tail_layers),
                               tail_relu=tuple(tail_relu))
    return pl.pallas_call(
        kernel,
        out_shape=jax.ShapeDtypeStruct((n, out_dim), jnp.float32),
        grid=(n // tm,),
        in_specs=in_specs,
        out_specs=pl.BlockSpec((tm, out_dim), lambda i: (i, 0)),
        compiler_params=pltpu.CompilerParams(
            dimension_semantics=("parallel",)),
    )(*args)


def _lstm_block_kernel(gx_ref, whh_ref, o_ref, *, hdim):
    """LSTM over all T timesteps for one node block; h/c carried in vregs."""
    t_steps = gx_ref.shape[0]
    nb = gx_ref.shape[1]

    def step(t, carry):
        h, c = carry
        # input pre-activations (x_t @ W_ih + b) were precomputed (bf16 slab);
        # only h @ W_hh remains on the serial per-timestep critical path.
        gates = gx_ref[t].astype(jnp.float32) + jnp.dot(
            h.astype(whh_ref.dtype), whh_ref[...],
            preferred_element_type=jnp.float32)
        # gate slices are 128-lane aligned (hdim == 128 after padding)
        i_g = jax.nn.sigmoid(gates[:, 0 * hdim:1 * hdim])
        f_g = jax.nn.sigmoid(gates[:, 1 * hdim:2 * hdim])
        g_g = jnp.tanh(gates[:, 2 * hdim:3 * hdim])
        o_g = jax.nn.sigmoid(gates[:, 3 * hdim:4 * hdim])
        c_new = f_g * c + i_g * g_g
        h_new = o_g * jnp.tanh(c_new)
        return (h_new, c_new)

    h0 = jnp.zeros((nb, hdim), jnp.float32)
    c0 = jnp.zeros((nb, hdim), jnp.float32)
    h_fin, _ = lax.fori_loop(0, t_steps, step, (h0, c0), unroll=True)
    o_ref[...] = h_fin.astype(o_ref.dtype)


def pallas_lstm_recurrence(gates_x_tn4h, w_hh, node_tile=32):
    """Grid over node blocks (parallel); timestep loop unrolled in-kernel."""
    t, n, g4 = gates_x_tn4h.shape
    h = g4 // 4
    # NB kept <= 32 rows so the (NB, 4H) f32 gates tile stays well under the
    # 64-vreg register file (avoids spills turning the loop ld/st-bound).
    nb = _node_tile(n, node_tile)
    # TODO(synk): chunk T per grid step on v7x if (T, NB, 4H) bf16 exceeds the
    #             scoped VMEM budget when double-buffered.
    return pl.pallas_call(
        functools.partial(_lstm_block_kernel, hdim=h),
        out_shape=jax.ShapeDtypeStruct((n, h), jnp.float32),
        grid=(n // nb,),
        in_specs=[pl.BlockSpec((t, nb, g4), lambda i: (0, i, 0)),
                  pl.BlockSpec((h, g4), lambda i: (0, 0))],   # W_hh resident
        out_specs=pl.BlockSpec((nb, h), lambda i: (i, 0)),
        compiler_params=pltpu.CompilerParams(
            dimension_semantics=("parallel",)),
    )(gates_x_tn4h, w_hh)


# ------------------------------ model glue ---------------------------------

def sage_conv(x_pad, neigh_idx_flat, neigh_mask_flat, p,
              tail_layers=(), tail_relu=()):
    """One SAGEConv(aggr='lstm', project=True) layer + ReLU (+ fused tail)."""
    n = x_pad.shape[0]
    # 1) neighbor-feature projection (+ReLU)   -- tiled Pallas matmul
    x_proj = pallas_linear_chain(x_pad, [(p['proj_w'], p['proj_b'])], [True])
    # 2) dense, zero-padded neighbor sequences, time-major & flattened.
    # TODO(synk): data-dependent edge gather stays in plain JAX (XLA gather);
    #             could be fused via PrefetchScalarGridSpec + pl.Element rows.
    seq_flat = x_proj[neigh_idx_flat]                            # (T*N, C)
    # 3) hoisted LSTM input projection: one big MXU matmul for all timesteps,
    #    neighbor mask fused in, result stored as bf16 (largest intermediate).
    gates_x = pallas_linear_chain(seq_flat, [(p['w_ih'], p['b_lstm'])], [False],
                                  mask=neigh_mask_flat,
                                  out_dtype=jnp.bfloat16)
    t = neigh_idx_flat.shape[0] // n
    gates_x = gates_x.reshape(t, n, -1)                          # (T, N, 4H)
    # 4) serial recurrence: node-parallel grid, in-kernel unrolled T loop
    agg = pallas_lstm_recurrence(gates_x, p['w_hh'])
    # 5) out = relu(agg @ W_l + x @ W_r + b), optionally fused with the MLP
    #    tail, all in a single Pallas kernel (no concat, no HBM round trip).
    return pallas_sage_out(agg, x_pad, p['lin_l_w'], p['lin_r_w'], p['lin_l_b'],
                           tail_layers, tail_relu)


def gcn_forward(params, x, edge_index, neigh_idx_flat, neigh_mask_flat,
                out_dim):
    n, f = x.shape
    x_pad = jnp.pad(x, ((0, 0), (0, LANE - f)))
    h = sage_conv(x_pad, neigh_idx_flat, neigh_mask_flat, params['conv1'])
    # conv2 output projection + lin1 + lin2 + lin3 fused into one pallas_call
    h = sage_conv(h, neigh_idx_flat, neigh_mask_flat, params['conv2'],
                  tail_layers=(params['lin1'], params['lin2'], params['lin3']),
                  tail_relu=(True, True, True))
    return [h[:, :out_dim], edge_index]


# --------------------------- parameter building ----------------------------

def _pad2(a, rows, cols):
    return jnp.pad(a, ((0, rows - a.shape[0]), (0, cols - a.shape[1])))


def _pad1(a, n):
    return jnp.pad(a, (0, n - a.shape[0]))


def _pad_gate_cols(w, h_log, p_in, p_h):
    """(in, 4*h_log) -> (p_in, 4*p_h) with each gate block 128-lane aligned."""
    parts = [_pad2(w[:, g * h_log:(g + 1) * h_log], p_in, p_h) for g in range(4)]
    return jnp.concatenate(parts, axis=1)


def _pad_gate_vec(b, h_log, p_h):
    parts = [_pad1(b[g * h_log:(g + 1) * h_log], p_h) for g in range(4)]
    return jnp.concatenate(parts)


def init_params(key, feat, hidden):
    h_half = hidden // 2
    h_big = int(hidden * 1.5)
    keys = iter(jax.random.split(key, 64))

    def mat(i, o):
        return (1.0 / np.sqrt(i)) * jax.random.normal(
            next(keys), (i, o), dtype=jnp.float32)

    def vec(o):
        return 0.1 * jax.random.normal(next(keys), (o,), dtype=jnp.float32)

    def linear(i, o):
        return (_pad2(mat(i, o), LANE, LANE).astype(jnp.bfloat16),
                _pad1(vec(o), LANE))

    def sage(c_in, c_out):
        # LSTM aggregation hidden size == c_in (post-projection channel count)
        proj_w, proj_b = linear(c_in, c_in)
        w_ih = _pad_gate_cols(mat(c_in, 4 * c_in), c_in, LANE, LANE)
        w_hh = _pad_gate_cols(mat(c_in, 4 * c_in), c_in, LANE, LANE)
        b_lstm = _pad_gate_vec(vec(4 * c_in), c_in, LANE)   # combined b_ih+b_hh
        return dict(
            proj_w=proj_w, proj_b=proj_b,
            w_ih=w_ih.astype(jnp.bfloat16), w_hh=w_hh.astype(jnp.bfloat16),
            b_lstm=b_lstm,
            lin_l_w=_pad2(mat(c_in, c_out), LANE, LANE).astype(jnp.bfloat16),
            lin_r_w=_pad2(mat(c_in, c_out), LANE, LANE).astype(jnp.bfloat16),
            lin_l_b=_pad1(vec(c_out), LANE),
        )

    return dict(
        conv1=sage(feat, h_half),
        conv2=sage(h_half, hidden),
        lin1=linear(hidden, h_big),
        lin2=linear(h_big, h_half),
        lin3=linear(h_half, h_half),
    )


def build_dense_neighbors(edge_index, num_nodes):
    """Group source nodes by destination; return time-major flattened views."""
    src, dst = edge_index
    neigh = [[] for _ in range(num_nodes)]
    for s, d in zip(src.tolist(), dst.tolist()):
        neigh[int(d)].append(int(s))
    max_deg = max(1, max(len(v) for v in neigh))
    idx = np.zeros((num_nodes, max_deg), dtype=np.int32)
    mask = np.zeros((num_nodes, max_deg), dtype=np.float32)
    for i, v in enumerate(neigh):
        for j, s in enumerate(v):
            idx[i, j] = s
            mask[i, j] = 1.0
    # time-major & flattened: feeds the hoisted (T*N, C) LSTM input matmul
    idx_flat = np.ascontiguousarray(idx.T).reshape(-1)           # (T*N,)
    mask_flat = np.ascontiguousarray(mask.T).reshape(-1, 1)      # (T*N, 1)
    return jnp.asarray(idx_flat), jnp.asarray(mask_flat)


# --------------------------------- main -------------------------------------

if __name__ == "__main__":
    FEAT, HIDDEN, N = 8, 32, 16

    key = jax.random.PRNGKey(0)
    k_x, k_p = jax.random.split(key)

    # node features
    x = jax.random.normal(k_x, (N, FEAT), dtype=jnp.float32)

    # deterministic small graph: bidirectional ring + a few extra edges
    src, dst = [], []
    for i in range(N):
        src += [i, (i + 1) % N]
        dst += [(i + 1) % N, i]
    for i in range(0, N, 4):
        src.append(i)
        dst.append((i + 5) % N)
    edge_index = np.stack([np.array(src, np.int32), np.array(dst, np.int32)])

    neigh_idx_flat, neigh_mask_flat = build_dense_neighbors(edge_index, N)
    params = init_params(k_p, FEAT, HIDDEN)

    fwd = jax.jit(functools.partial(gcn_forward, out_dim=HIDDEN // 2))
    out, ei = fwd(params, x, jnp.asarray(edge_index),
                  neigh_idx_flat, neigh_mask_flat)
    out = jax.block_until_ready(out)

    assert out.shape == (N, HIDDEN // 2), out.shape
    assert bool(jnp.all(jnp.isfinite(out)))
    print("KERNEL_OK")
</pallas_src>

<mosaic_0001>
module attributes {stable_mosaic.version = 11 : i64} {
  func.func @_linear_chain_kernel(%arg0: i32, %arg1: memref<16x128xf32, #tpu.memory_space<vmem>>, %arg2: memref<128x128xbf16, #tpu.memory_space<vmem>>, %arg3: memref<1x128xf32, #tpu.memory_space<vmem>>, %arg4: memref<16x128xf32, #tpu.memory_space<vmem>>) attributes {dimension_semantics = [#tpu.dimension_semantics<parallel>], iteration_bounds = array<i64: 1>, scalar_prefetch = 0 : i64, scratch_operands = 0 : i64, tpu.core_type = #tpu.core_type<tc>, window_params = [{transform_indices = @transform_0, window_bounds = array<i64: 16, 128>}, {pipeline_mode = #tpu.pipeline_mode<synchronous>, transform_indices = @transform_1, window_bounds = array<i64: 128, 128>}, {pipeline_mode = #tpu.pipeline_mode<synchronous>, transform_indices = @transform_2, window_bounds = array<i64: 1, 128>}, {transform_indices = @transform_3, window_bounds = array<i64: 16, 128>}]} {
    %c0 = arith.constant 0 : index
    %c0_0 = arith.constant 0 : index
    %0 = vector.load %arg1[%c0, %c0_0] : memref<16x128xf32, #tpu.memory_space<vmem>>, vector<16x128xf32>
    %1 = arith.truncf %0 : vector<16x128xf32> to vector<16x128xbf16>
    %c0_1 = arith.constant 0 : index
    %c0_2 = arith.constant 0 : index
    %2 = vector.load %arg2[%c0_1, %c0_2] : memref<128x128xbf16, #tpu.memory_space<vmem>>, vector<128x128xbf16>
    %cst = arith.constant dense<0.000000e+00> : vector<16x128xf32>
    %3 = tpu.matmul %1, %2, %cst {dimension_numbers = #tpu.dot_dimension_numbers<[1], [0], [0], [1], [0, 0, 1, 1], [], []>} : vector<16x128xbf16>, vector<128x128xbf16>, vector<16x128xf32> -> vector<16x128xf32>
    %c0_3 = arith.constant 0 : index
    %c0_4 = arith.constant 0 : index
    %4 = vector.load %arg3[%c0_3, %c0_4] : memref<1x128xf32, #tpu.memory_space<vmem>>, vector<1x128xf32>
    %5 = vector.broadcast %4 : vector<1x128xf32> to vector<16x128xf32>
    %6 = arith.addf %3, %5 : vector<16x128xf32>
    %cst_5 = arith.constant 0.000000e+00 : f32
    %7 = vector.broadcast %cst_5 : f32 to vector<16x128xf32>
    %8 = arith.maximumf %6, %7 : vector<16x128xf32>
    %c0_6 = arith.constant 0 : index
    %c0_7 = arith.constant 0 : index
    %9 = vector.load %arg4[%c0_6, %c0_7] : memref<16x128xf32, #tpu.memory_space<vmem>>, vector<16x128xf32>
    tpu.vector_store %arg4[%c0_6, %c0_7], %8 {strides = array<i32>} : memref<16x128xf32, #tpu.memory_space<vmem>>, vector<16x128xf32>,
    return
  }
  func.func @transform_0(%arg0: i32) -> (i32, i32) {
    %c0_i32 = arith.constant 0 : i32
    %c0_i32_0 = arith.constant 0 : i32
    return %arg0, %c0_i32 : i32, i32
  }
  func.func @transform_1(%arg0: i32) -> (i32, i32) {
    %c0_i32 = arith.constant 0 : i32
    %c0_i32_0 = arith.constant 0 : i32
    %c0_i32_1 = arith.constant 0 : i32
    return %c0_i32, %c0_i32_0 : i32, i32
  }
  func.func @transform_2(%arg0: i32) -> (i32, i32) {
    %c0_i32 = arith.constant 0 : i32
    %c0_i32_0 = arith.constant 0 : i32
    %c0_i32_1 = arith.constant 0 : i32
    return %c0_i32, %c0_i32_0 : i32, i32
  }
  func.func @transform_3(%arg0: i32) -> (i32, i32) {
    %c0_i32 = arith.constant 0 : i32
    %c0_i32_0 = arith.constant 0 : i32
    return %arg0, %c0_i32 : i32, i32
  }
}

module attributes {stable_mosaic.version = 11 : i64} {
  func.func @_linear_chain_kernel(%arg0: i32, %arg1: memref<48x128xf32, #tpu.memory_space<vmem>>, %arg2: memref<48x1xf32, #tpu.memory_space<vmem>>, %arg3: memref<128x512xbf16, #tpu.memory_space<vmem>>, %arg4: memref<1x512xf32, #tpu.memory_space<vmem>>, %arg5: memref<48x512xbf16, #tpu.memory_space<vmem>>) attributes {dimension_semantics = [#tpu.dimension_semantics<parallel>], iteration_bounds = array<i64: 1>, scalar_prefetch = 0 : i64, scratch_operands = 0 : i64, tpu.core_type = #tpu.core_type<tc>, window_params = [{transform_indices = @transform_0, window_bounds = array<i64: 48, 128>}, {transform_indices = @transform_1, window_bounds = array<i64: 48, 1>}, {pipeline_mode = #tpu.pipeline_mode<synchronous>, transform_indices = @transform_2, window_bounds = array<i64: 128, 512>}, {pipeline_mode = #tpu.pipeline_mode<synchronous>, transform_indices = @transform_3, window_bounds = array<i64: 1, 512>}, {transform_indices = @transform_4, window_bounds = array<i64: 48, 512>}]} {
    %c0 = arith.constant 0 : index
    %c0_0 = arith.constant 0 : index
    %0 = vector.load %arg1[%c0, %c0_0] : memref<48x128xf32, #tpu.memory_space<vmem>>, vector<48x128xf32>
    %c0_1 = arith.constant 0 : index
    %c0_2 = arith.constant 0 : index
    %1 = vector.load %arg2[%c0_1, %c0_2] : memref<48x1xf32, #tpu.memory_space<vmem>>, vector<48x1xf32>
    %2 = vector.broadcast %1 : vector<48x1xf32> to vector<48x128xf32>
    %3 = arith.mulf %0, %2 : vector<48x128xf32>
    %4 = arith.truncf %3 : vector<48x128xf32> to vector<48x128xbf16>
    %c0_3 = arith.constant 0 : index
    %c0_4 = arith.constant 0 : index
    %5 = vector.load %arg3[%c0_3, %c0_4] : memref<128x512xbf16, #tpu.memory_space<vmem>>, vector<128x512xbf16>
    %cst = arith.constant dense<0.000000e+00> : vector<48x512xf32>
    %6 = tpu.matmul %4, %5, %cst {dimension_numbers = #tpu.dot_dimension_numbers<[1], [0], [0], [1], [0, 0, 1, 1], [], []>} : vector<48x128xbf16>, vector<128x512xbf16>, vector<48x512xf32> -> vector<48x512xf32>
    %c0_5 = arith.constant 0 : index
    %c0_6 = arith.constant 0 : index
    %7 = vector.load %arg4[%c0_5, %c0_6] : memref<1x512xf32, #tpu.memory_space<vmem>>, vector<1x512xf32>
    %8 = vector.broadcast %7 : vector<1x512xf32> to vector<48x512xf32>
    %9 = arith.addf %6, %8 : vector<48x512xf32>
    %10 = arith.truncf %9 : vector<48x512xf32> to vector<48x512xbf16>
    %c0_7 = arith.constant 0 : index
    %c0_8 = arith.constant 0 : index
    %11 = vector.load %arg5[%c0_7, %c0_8] : memref<48x512xbf16, #tpu.memory_space<vmem>>, vector<48x512xbf16>
    tpu.vector_store %arg5[%c0_7, %c0_8], %10 {strides = array<i32>} : memref<48x512xbf16, #tpu.memory_space<vmem>>, vector<48x512xbf16>,
    return
  }
  func.func @transform_0(%arg0: i32) -> (i32, i32) {
    %c0_i32 = arith.constant 0 : i32
    %c0_i32_0 = arith.constant 0 : i32
    return %arg0, %c0_i32 : i32, i32
  }
  func.func @transform_1(%arg0: i32) -> (i32, i32) {
    %c0_i32 = arith.constant 0 : i32
    %c0_i32_0 = arith.constant 0 : i32
    return %arg0, %c0_i32 : i32, i32
  }
  func.func @transform_2(%arg0: i32) -> (i32, i32) {
    %c0_i32 = arith.constant 0 : i32
    %c0_i32_0 = arith.constant 0 : i32
    %c0_i32_1 = arith.constant 0 : i32
    return %c0_i32, %c0_i32_0 : i32, i32
  }
  func.func @transform_3(%arg0: i32) -> (i32, i32) {
    %c0_i32 = arith.constant 0 : i32
    %c0_i32_0 = arith.constant 0 : i32
    %c0_i32_1 = arith.constant 0 : i32
    return %c0_i32, %c0_i32_0 : i32, i32
  }
  func.func @transform_4(%arg0: i32) -> (i32, i32) {
    %c0_i32 = arith.constant 0 : i32
    %c0_i32_0 = arith.constant 0 : i32
    return %arg0, %c0_i32 : i32, i32
  }
}

module attributes {stable_mosaic.version = 11 : i64} {
  func.func @_lstm_block_kernel(%arg0: i32, %arg1: memref<3x16x512xbf16, #tpu.memory_space<vmem>>, %arg2: memref<128x512xbf16, #tpu.memory_space<vmem>>, %arg3: memref<16x128xf32, #tpu.memory_space<vmem>>) attributes {dimension_semantics = [#tpu.dimension_semantics<parallel>], iteration_bounds = array<i64: 1>, scalar_prefetch = 0 : i64, scratch_operands = 0 : i64, tpu.core_type = #tpu.core_type<tc>, window_params = [{transform_indices = @transform_0, window_bounds = array<i64: 3, 16, 512>}, {pipeline_mode = #tpu.pipeline_mode<synchronous>, transform_indices = @transform_1, window_bounds = array<i64: 128, 512>}, {transform_indices = @transform_2, window_bounds = array<i64: 16, 128>}]} {
    %cst = arith.constant 0.000000e+00 : f32
    %0 = vector.broadcast %cst : f32 to vector<16x128xf32>
    %cst_0 = arith.constant 0.000000e+00 : f32
    %1 = vector.broadcast %cst_0 : f32 to vector<16x128xf32>
    %c0_i32 = arith.constant 0 : i32
    %2 = arith.index_cast %c0_i32 : i32 to index
    %c0 = arith.constant 0 : index
    %c0_1 = arith.constant 0 : index
    %3 = vector.load %arg1[%2, %c0, %c0_1] : memref<3x16x512xbf16, #tpu.memory_space<vmem>>, vector<1x16x512xbf16>
    %4 = vector.shape_cast %3 : vector<1x16x512xbf16> to vector<16x512xbf16>
    %5 = arith.extf %4 : vector<16x512xbf16> to vector<16x512xf32>
    %6 = arith.truncf %0 : vector<16x128xf32> to vector<16x128xbf16>
    %c0_2 = arith.constant 0 : index
    %c0_3 = arith.constant 0 : index
    %7 = vector.load %arg2[%c0_2, %c0_3] : memref<128x512xbf16, #tpu.memory_space<vmem>>, vector<128x512xbf16>
    %cst_4 = arith.constant dense<0.000000e+00> : vector<16x512xf32>
    %8 = tpu.matmul %6, %7, %cst_4 {dimension_numbers = #tpu.dot_dimension_numbers<[1], [0], [0], [1], [0, 0, 1, 1], [], []>} : vector<16x128xbf16>, vector<128x512xbf16>, vector<16x512xf32> -> vector<16x512xf32>
    %9 = arith.addf %5, %8 : vector<16x512xf32>
    %10 = vector.extract_strided_slice %9 {offsets = [0, 0], sizes = [16, 128], strides = [1, 1]} : vector<16x512xf32> to vector<16x128xf32>
    %11 = arith.negf %10 : vector<16x128xf32>
    %12 = math.exp %11 : vector<16x128xf32>
    %cst_5 = arith.constant 1.000000e+00 : f32
    %13 = vector.broadcast %cst_5 : f32 to vector<16x128xf32>
    %14 = arith.addf %13, %12 : vector<16x128xf32>
    %15 = arith.divf %13, %14 : vector<16x128xf32>
    %16 = vector.extract_strided_slice %9 {offsets = [0, 128], sizes = [16, 128], strides = [1, 1]} : vector<16x512xf32> to vector<16x128xf32>
    %17 = arith.negf %16 : vector<16x128xf32>
    %18 = math.exp %17 : vector<16x128xf32>
    %cst_6 = arith.constant 1.000000e+00 : f32
    %19 = vector.broadcast %cst_6 : f32 to vector<16x128xf32>
    %20 = arith.addf %19, %18 : vector<16x128xf32>
    %21 = arith.divf %19, %20 : vector<16x128xf32>
    %22 = vector.extract_strided_slice %9 {offsets = [0, 256], sizes = [16, 128], strides = [1, 1]} : vector<16x512xf32> to vector<16x128xf32>
    %23 = math.tanh %22 : vector<16x128xf32>
    %24 = vector.extract_strided_slice %9 {offsets = [0, 384], sizes = [16, 128], strides = [1, 1]} : vector<16x512xf32> to vector<16x128xf32>
    %25 = arith.negf %24 : vector<16x128xf32>
    %26 = math.exp %25 : vector<16x128xf32>
    %cst_7 = arith.constant 1.000000e+00 : f32
    %27 = vector.broadcast %cst_7 : f32 to vector<16x128xf32>
    %28 = arith.addf %27, %26 : vector<16x128xf32>
    %29 = arith.divf %27, %28 : vector<16x128xf32>
    %30 = arith.mulf %21, %1 : vector<16x128xf32>
    %31 = arith.mulf %15, %23 : vector<16x128xf32>
    %32 = arith.addf %30, %31 : vector<16x128xf32>
    %33 = math.tanh %32 : vector<16x128xf32>
    %34 = arith.mulf %29, %33 : vector<16x128xf32>
    %c1_i32 = arith.constant 1 : i32
    %35 = arith.index_cast %c1_i32 : i32 to index
    %c0_8 = arith.constant 0 : index
    %c0_9 = arith.constant 0 : index
    %36 = vector.load %arg1[%35, %c0_8, %c0_9] : memref<3x16x512xbf16, #tpu.memory_space<vmem>>, vector<1x16x512xbf16>
    %37 = vector.shape_cast %36 : vector<1x16x512xbf16> to vector<16x512xbf16>
    %38 = arith.extf %37 : vector<16x512xbf16> to vector<16x512xf32>
    %39 = arith.truncf %34 : vector<16x128xf32> to vector<16x128xbf16>
    %c0_10 = arith.constant 0 : index
    %c0_11 = arith.constant 0 : index
    %40 = vector.load %arg2[%c0_10, %c0_11] : memref<128x512xbf16, #tpu.memory_space<vmem>>, vector<128x512xbf16>
    %cst_12 = arith.constant dense<0.000000e+00> : vector<16x512xf32>
    %41 = tpu.matmul %39, %40, %cst_12 {dimension_numbers = #tpu.dot_dimension_numbers<[1], [0], [0], [1], [0, 0, 1, 1], [], []>} : vector<16x128xbf16>, vector<128x512xbf16>, vector<16x512xf32> -> vector<16x512xf32>
    %42 = arith.addf %38, %41 : vector<16x512xf32>
    %43 = vector.extract_strided_slice %42 {offsets = [0, 0], sizes = [16, 128], strides = [1, 1]} : vector<16x512xf32> to vector<16x128xf32>
    %44 = arith.negf %43 : vector<16x128xf32>
    %45 = math.exp %44 : vector<16x128xf32>
    %cst_13 = arith.constant 1.000000e+00 : f32
    %46 = vector.broadcast %cst_13 : f32 to vector<16x128xf32>
    %47 = arith.addf %46, %45 : vector<16x128xf32>
    %48 = arith.divf %46, %47 : vector<16x128xf32>
    %49 = vector.extract_strided_slice %42 {offsets = [0, 128], sizes = [16, 128], strides = [1, 1]} : vector<16x512xf32> to vector<16x128xf32>
    %50 = arith.negf %49 : vector<16x128xf32>
    %51 = math.exp %50 : vector<16x128xf32>
    %cst_14 = arith.constant 1.000000e+00 : f32
    %52 = vector.broadcast %cst_14 : f32 to vector<16x128xf32>
    %53 = arith.addf %52, %51 : vector<16x128xf32>
    %54 = arith.divf %52, %53 : vector<16x128xf32>
    %55 = vector.extract_strided_slice %42 {offsets = [0, 256], sizes = [16, 128], strides = [1, 1]} : vector<16x512xf32> to vector<16x128xf32>
    %56 = math.tanh %55 : vector<16x128xf32>
    %57 = vector.extract_strided_slice %42 {offsets = [0, 384], sizes = [16, 128], strides = [1, 1]} : vector<16x512xf32> to vector<16x128xf32>
    %58 = arith.negf %57 : vector<16x128xf32>
    %59 = math.exp %58 : vector<16x128xf32>
    %cst_15 = arith.constant 1.000000e+00 : f32
    %60 = vector.broadcast %cst_15 : f32 to vector<16x128xf32>
    %61 = arith.addf %60, %59 : vector<16x128xf32>
    %62 = arith.divf %60, %61 : vector<16x128xf32>
    %63 = arith.mulf %54, %32 : vector<16x128xf32>
    %64 = arith.mulf %48, %56 : vector<16x128xf32>
    %65 = arith.addf %63, %64 : vector<16x128xf32>
    %66 = math.tanh %65 : vector<16x128xf32>
    %67 = arith.mulf %62, %66 : vector<16x128xf32>
    %c2_i32 = arith.constant 2 : i32
    %68 = arith.index_cast %c2_i32 : i32 to index
    %c0_16 = arith.constant 0 : index
    %c0_17 = arith.constant 0 : index
    %69 = vector.load %arg1[%68, %c0_16, %c0_17] : memref<3x16x512xbf16, #tpu.memory_space<vmem>>, vector<1x16x512xbf16>
    %70 = vector.shape_cast %69 : vector<1x16x512xbf16> to vector<16x512xbf16>
    %71 = arith.extf %70 : vector<16x512xbf16> to vector<16x512xf32>
    %72 = arith.truncf %67 : vector<16x128xf32> to vector<16x128xbf16>
    %c0_18 = arith.constant 0 : index
    %c0_19 = arith.constant 0 : index
    %73 = vector.load %arg2[%c0_18, %c0_19] : memref<128x512xbf16, #tpu.memory_space<vmem>>, vector<128x512xbf16>
    %cst_20 = arith.constant dense<0.000000e+00> : vector<16x512xf32>
    %74 = tpu.matmul %72, %73, %cst_20 {dimension_numbers = #tpu.dot_dimension_numbers<[1], [0], [0], [1], [0, 0, 1, 1], [], []>} : vector<16x128xbf16>, vector<128x512xbf16>, vector<16x512xf32> -> vector<16x512xf32>
    %75 = arith.addf %71, %74 : vector<16x512xf32>
    %76 = vector.extract_strided_slice %75 {offsets = [0, 0], sizes = [16, 128], strides = [1, 1]} : vector<16x512xf32> to vector<16x128xf32>
    %77 = arith.negf %76 : vector<16x128xf32>
    %78 = math.exp %77 : vector<16x128xf32>
    %cst_21 = arith.constant 1.000000e+00 : f32
    %79 = vector.broadcast %cst_21 : f32 to vector<16x128xf32>
    %80 = arith.addf %79, %78 : vector<16x128xf32>
    %81 = arith.divf %79, %80 : vector<16x128xf32>
    %82 = vector.extract_strided_slice %75 {offsets = [0, 128], sizes = [16, 128], strides = [1, 1]} : vector<16x512xf32> to vector<16x128xf32>
    %83 = arith.negf %82 : vector<16x128xf32>
    %84 = math.exp %83 : vector<16x128xf32>
    %cst_22 = arith.constant 1.000000e+00 : f32
    %85 = vector.broadcast %cst_22 : f32 to vector<16x128xf32>
    %86 = arith.addf %85, %84 : vector<16x128xf32>
    %87 = arith.divf %85, %86 : vector<16x128xf32>
    %88 = vector.extract_strided_slice %75 {offsets = [0, 256], sizes = [16, 128], strides = [1, 1]} : vector<16x512xf32> to vector<16x128xf32>
    %89 = math.tanh %88 : vector<16x128xf32>
    %90 = vector.extract_strided_slice %75 {offsets = [0, 384], sizes = [16, 128], strides = [1, 1]} : vector<16x512xf32> to vector<16x128xf32>
    %91 = arith.negf %90 : vector<16x128xf32>
    %92 = math.exp %91 : vector<16x128xf32>
    %cst_23 = arith.constant 1.000000e+00 : f32
    %93 = vector.broadcast %cst_23 : f32 to vector<16x128xf32>
    %94 = arith.addf %93, %92 : vector<16x128xf32>
    %95 = arith.divf %93, %94 : vector<16x128xf32>
    %96 = arith.mulf %87, %65 : vector<16x128xf32>
    %97 = arith.mulf %81, %89 : vector<16x128xf32>
    %98 = arith.addf %96, %97 : vector<16x128xf32>
    %99 = math.tanh %98 : vector<16x128xf32>
    %100 = arith.mulf %95, %99 : vector<16x128xf32>
    %c3_i32 = arith.constant 3 : i32
    %c0_24 = arith.constant 0 : index
    %c0_25 = arith.constant 0 : index
    %101 = vector.load %arg3[%c0_24, %c0_25] : memref<16x128xf32, #tpu.memory_space<vmem>>, vector<16x128xf32>
    tpu.vector_store %arg3[%c0_24, %c0_25], %100 {strides = array<i32>} : memref<16x128xf32, #tpu.memory_space<vmem>>, vector<16x128xf32>,
    return
  }
  func.func @transform_0(%arg0: i32) -> (i32, i32, i32) {
    %c0_i32 = arith.constant 0 : i32
    %c0_i32_0 = arith.constant 0 : i32
    %c0_i32_1 = arith.constant 0 : i32
    return %c0_i32, %arg0, %c0_i32_0 : i32, i32, i32
  }
  func.func @transform_1(%arg0: i32) -> (i32, i32) {
    %c0_i32 = arith.constant 0 : i32
    %c0_i32_0 = arith.constant 0 : i32
    %c0_i32_1 = arith.constant 0 : i32
    return %c0_i32, %c0_i32_0 : i32, i32
  }
  func.func @transform_2(%arg0: i32) -> (i32, i32) {
    %c0_i32 = arith.constant 0 : i32
    %c0_i32_0 = arith.constant 0 : i32
    return %arg0, %c0_i32 : i32, i32
  }
}

module attributes {stable_mosaic.version = 11 : i64} {
  func.func @_sage_out_kernel(%arg0: i32, %arg1: memref<16x128xf32, #tpu.memory_space<vmem>>, %arg2: memref<16x128xf32, #tpu.memory_space<vmem>>, %arg3: memref<128x128xbf16, #tpu.memory_space<vmem>>, %arg4: memref<128x128xbf16, #tpu.memory_space<vmem>>, %arg5: memref<1x128xf32, #tpu.memory_space<vmem>>, %arg6: memref<16x128xf32, #tpu.memory_space<vmem>>) attributes {dimension_semantics = [#tpu.dimension_semantics<parallel>], iteration_bounds = array<i64: 1>, scalar_prefetch = 0 : i64, scratch_operands = 0 : i64, tpu.core_type = #tpu.core_type<tc>, window_params = [{transform_indices = @transform_0, window_bounds = array<i64: 16, 128>}, {transform_indices = @transform_1, window_bounds = array<i64: 16, 128>}, {pipeline_mode = #tpu.pipeline_mode<synchronous>, transform_indices = @transform_2, window_bounds = array<i64: 128, 128>}, {pipeline_mode = #tpu.pipeline_mode<synchronous>, transform_indices = @transform_3, window_bounds = array<i64: 128, 128>}, {pipeline_mode = #tpu.pipeline_mode<synchronous>, transform_indices = @transform_4, window_bounds = array<i64: 1, 128>}, {transform_indices = @transform_5, window_bounds = array<i64: 16, 128>}]} {
    %c0 = arith.constant 0 : index
    %c0_0 = arith.constant 0 : index
    %0 = vector.load %arg1[%c0, %c0_0] : memref<16x128xf32, #tpu.memory_space<vmem>>, vector<16x128xf32>
    %1 = arith.truncf %0 : vector<16x128xf32> to vector<16x128xbf16>
    %c0_1 = arith.constant 0 : index
    %c0_2 = arith.constant 0 : index
    %2 = vector.load %arg3[%c0_1, %c0_2] : memref<128x128xbf16, #tpu.memory_space<vmem>>, vector<128x128xbf16>
    %cst = arith.constant dense<0.000000e+00> : vector<16x128xf32>
    %3 = tpu.matmul %1, %2, %cst {dimension_numbers = #tpu.dot_dimension_numbers<[1], [0], [0], [1], [0, 0, 1, 1], [], []>} : vector<16x128xbf16>, vector<128x128xbf16>, vector<16x128xf32> -> vector<16x128xf32>
    %c0_3 = arith.constant 0 : index
    %c0_4 = arith.constant 0 : index
    %4 = vector.load %arg2[%c0_3, %c0_4] : memref<16x128xf32, #tpu.memory_space<vmem>>, vector<16x128xf32>
    %5 = arith.truncf %4 : vector<16x128xf32> to vector<16x128xbf16>
    %c0_5 = arith.constant 0 : index
    %c0_6 = arith.constant 0 : index
    %6 = vector.load %arg4[%c0_5, %c0_6] : memref<128x128xbf16, #tpu.memory_space<vmem>>, vector<128x128xbf16>
    %cst_7 = arith.constant dense<0.000000e+00> : vector<16x128xf32>
    %7 = tpu.matmul %5, %6, %cst_7 {dimension_numbers = #tpu.dot_dimension_numbers<[1], [0], [0], [1], [0, 0, 1, 1], [], []>} : vector<16x128xbf16>, vector<128x128xbf16>, vector<16x128xf32> -> vector<16x128xf32>
    %8 = arith.addf %3, %7 : vector<16x128xf32>
    %c0_8 = arith.constant 0 : index
    %c0_9 = arith.constant 0 : index
    %9 = vector.load %arg5[%c0_8, %c0_9] : memref<1x128xf32, #tpu.memory_space<vmem>>, vector<1x128xf32>
    %10 = vector.broadcast %9 : vector<1x128xf32> to vector<16x128xf32>
    %11 = arith.addf %8, %10 : vector<16x128xf32>
    %cst_10 = arith.constant 0.000000e+00 : f32
    %12 = vector.broadcast %cst_10 : f32 to vector<16x128xf32>
    %13 = arith.maximumf %11, %12 : vector<16x128xf32>
    %c0_11 = arith.constant 0 : index
    %c0_12 = arith.constant 0 : index
    %14 = vector.load %arg6[%c0_11, %c0_12] : memref<16x128xf32, #tpu.memory_space<vmem>>, vector<16x128xf32>
    tpu.vector_store %arg6[%c0_11, %c0_12], %13 {strides = array<i32>} : memref<16x128xf32, #tpu.memory_space<vmem>>, vector<16x128xf32>,
    return
  }
  func.func @transform_0(%arg0: i32) -> (i32, i32) {
    %c0_i32 = arith.constant 0 : i32
    %c0_i32_0 = arith.constant 0 : i32
    return %arg0, %c0_i32 : i32, i32
  }
  func.func @transform_1(%arg0: i32) -> (i32, i32) {
    %c0_i32 = arith.constant 0 : i32
    %c0_i32_0 = arith.constant 0 : i32
    return %arg0, %c0_i32 : i32, i32
  }
  func.func @transform_2(%arg0: i32) -> (i32, i32) {
    %c0_i32 = arith.constant 0 : i32
    %c0_i32_0 = arith.constant 0 : i32
    %c0_i32_1 = arith.constant 0 : i32
    return %c0_i32, %c0_i32_0 : i32, i32
  }
  func.func @transform_3(%arg0: i32) -> (i32, i32) {
    %c0_i32 = arith.constant 0 : i32
    %c0_i32_0 = arith.constant 0 : i32
    %c0_i32_1 = arith.constant 0 : i32
    return %c0_i32, %c0_i32_0 : i32, i32
  }
  func.func @transform_4(%arg0: i32) -> (i32, i32) {
    %c0_i32 = arith.constant 0 : i32
    %c0_i32_0 = arith.constant 0 : i32
    %c0_i32_1 = arith.constant 0 : i32
    return %c0_i32, %c0_i32_0 : i32, i32
  }
  func.func @transform_5(%arg0: i32) -> (i32, i32) {
    %c0_i32 = arith.constant 0 : i32
    %c0_i32_0 = arith.constant 0 : i32
    return %arg0, %c0_i32 : i32, i32
  }
}

module attributes {stable_mosaic.version = 11 : i64} {
  func.func @_sage_out_kernel(%arg0: i32, %arg1: memref<16x128xf32, #tpu.memory_space<vmem>>, %arg2: memref<16x128xf32, #tpu.memory_space<vmem>>, %arg3: memref<128x128xbf16, #tpu.memory_space<vmem>>, %arg4: memref<128x128xbf16, #tpu.memory_space<vmem>>, %arg5: memref<1x128xf32, #tpu.memory_space<vmem>>, %arg6: memref<128x128xbf16, #tpu.memory_space<vmem>>, %arg7: memref<1x128xf32, #tpu.memory_space<vmem>>, %arg8: memref<128x128xbf16, #tpu.memory_space<vmem>>, %arg9: memref<1x128xf32, #tpu.memory_space<vmem>>, %arg10: memref<128x128xbf16, #tpu.memory_space<vmem>>, %arg11: memref<1x128xf32, #tpu.memory_space<vmem>>, %arg12: memref<16x128xf32, #tpu.memory_space<vmem>>) attributes {dimension_semantics = [#tpu.dimension_semantics<parallel>], iteration_bounds = array<i64: 1>, scalar_prefetch = 0 : i64, scratch_operands = 0 : i64, tpu.core_type = #tpu.core_type<tc>, window_params = [{transform_indices = @transform_0, window_bounds = array<i64: 16, 128>}, {transform_indices = @transform_1, window_bounds = array<i64: 16, 128>}, {pipeline_mode = #tpu.pipeline_mode<synchronous>, transform_indices = @transform_2, window_bounds = array<i64: 128, 128>}, {pipeline_mode = #tpu.pipeline_mode<synchronous>, transform_indices = @transform_3, window_bounds = array<i64: 128, 128>}, {pipeline_mode = #tpu.pipeline_mode<synchronous>, transform_indices = @transform_4, window_bounds = array<i64: 1, 128>}, {pipeline_mode = #tpu.pipeline_mode<synchronous>, transform_indices = @transform_5, window_bounds = array<i64: 128, 128>}, {pipeline_mode = #tpu.pipeline_mode<synchronous>, transform_indices = @transform_6, window_bounds = array<i64: 1, 128>}, {pipeline_mode = #tpu.pipeline_mode<synchronous>, transform_indices = @transform_7, window_bounds = array<i64: 128, 128>}, {pipeline_mode = #tpu.pipeline_mode<synchronous>, transform_indices = @transform_8, window_bounds = array<i64: 1, 128>}, {pipeline_mode = #tpu.pipeline_mode<synchronous>, transform_indices = @transform_9, window_bounds = array<i64: 128, 128>}, {pipeline_mode = #tpu.pipeline_mode<synchronous>, transform_indices = @transform_10, window_bounds = array<i64: 1, 128>}, {transform_indices = @transform_11, window_bounds = array<i64: 16, 128>}]} {
    %c0 = arith.constant 0 : index
    %c0_0 = arith.constant 0 : index
    %0 = vector.load %arg1[%c0, %c0_0] : memref<16x128xf32, #tpu.memory_space<vmem>>, vector<16x128xf32>
    %1 = arith.truncf %0 : vector<16x128xf32> to vector<16x128xbf16>
    %c0_1 = arith.constant 0 : index
    %c0_2 = arith.constant 0 : index
    %2 = vector.load %arg3[%c0_1, %c0_2] : memref<128x128xbf16, #tpu.memory_space<vmem>>, vector<128x128xbf16>
    %cst = arith.constant dense<0.000000e+00> : vector<16x128xf32>
    %3 = tpu.matmul %1, %2, %cst {dimension_numbers = #tpu.dot_dimension_numbers<[1], [0], [0], [1], [0, 0, 1, 1], [], []>} : vector<16x128xbf16>, vector<128x128xbf16>, vector<16x128xf32> -> vector<16x128xf32>
    %c0_3 = arith.constant 0 : index
    %c0_4 = arith.constant 0 : index
    %4 = vector.load %arg2[%c0_3, %c0_4] : memref<16x128xf32, #tpu.memory_space<vmem>>, vector<16x128xf32>
    %5 = arith.truncf %4 : vector<16x128xf32> to vector<16x128xbf16>
    %c0_5 = arith.constant 0 : index
    %c0_6 = arith.constant 0 : index
    %6 = vector.load %arg4[%c0_5, %c0_6] : memref<128x128xbf16, #tpu.memory_space<vmem>>, vector<128x128xbf16>
    %cst_7 = arith.constant dense<0.000000e+00> : vector<16x128xf32>
    %7 = tpu.matmul %5, %6, %cst_7 {dimension_numbers = #tpu.dot_dimension_numbers<[1], [0], [0], [1], [0, 0, 1, 1], [], []>} : vector<16x128xbf16>, vector<128x128xbf16>, vector<16x128xf32> -> vector<16x128xf32>
    %8 = arith.addf %3, %7 : vector<16x128xf32>
    %c0_8 = arith.constant 0 : index
    %c0_9 = arith.constant 0 : index
    %9 = vector.load %arg5[%c0_8, %c0_9] : memref<1x128xf32, #tpu.memory_space<vmem>>, vector<1x128xf32>
    %10 = vector.broadcast %9 : vector<1x128xf32> to vector<16x128xf32>
    %11 = arith.addf %8, %10 : vector<16x128xf32>
    %cst_10 = arith.constant 0.000000e+00 : f32
    %12 = vector.broadcast %cst_10 : f32 to vector<16x128xf32>
    %13 = arith.maximumf %11, %12 : vector<16x128xf32>
    %14 = arith.truncf %13 : vector<16x128xf32> to vector<16x128xbf16>
    %c0_11 = arith.constant 0 : index
    %c0_12 = arith.constant 0 : index
    %15 = vector.load %arg6[%c0_11, %c0_12] : memref<128x128xbf16, #tpu.memory_space<vmem>>, vector<128x128xbf16>
    %cst_13 = arith.constant dense<0.000000e+00> : vector<16x128xf32>
    %16 = tpu.matmul %14, %15, %cst_13 {dimension_numbers = #tpu.dot_dimension_numbers<[1], [0], [0], [1], [0, 0, 1, 1], [], []>} : vector<16x128xbf16>, vector<128x128xbf16>, vector<16x128xf32> -> vector<16x128xf32>
    %c0_14 = arith.constant 0 : index
    %c0_15 = arith.constant 0 : index
    %17 = vector.load %arg7[%c0_14, %c0_15] : memref<1x128xf32, #tpu.memory_space<vmem>>, vector<1x128xf32>
    %18 = vector.broadcast %17 : vector<1x128xf32> to vector<16x128xf32>
    %19 = arith.addf %16, %18 : vector<16x128xf32>
    %cst_16 = arith.constant 0.000000e+00 : f32
    %20 = vector.broadcast %cst_16 : f32 to vector<16x128xf32>
    %21 = arith.maximumf %19, %20 : vector<16x128xf32>
    %22 = arith.truncf %21 : vector<16x128xf32> to vector<16x128xbf16>
    %c0_17 = arith.constant 0 : index
    %c0_18 = arith.constant 0 : index
    %23 = vector.load %arg8[%c0_17, %c0_18] : memref<128x128xbf16, #tpu.memory_space<vmem>>, vector<128x128xbf16>
    %cst_19 = arith.constant dense<0.000000e+00> : vector<16x128xf32>
    %24 = tpu.matmul %22, %23, %cst_19 {dimension_numbers = #tpu.dot_dimension_numbers<[1], [0], [0], [1], [0, 0, 1, 1], [], []>} : vector<16x128xbf16>, vector<128x128xbf16>, vector<16x128xf32> -> vector<16x128xf32>
    %c0_20 = arith.constant 0 : index
    %c0_21 = arith.constant 0 : index
    %25 = vector.load %arg9[%c0_20, %c0_21] : memref<1x128xf32, #tpu.memory_space<vmem>>, vector<1x128xf32>
    %26 = vector.broadcast %25 : vector<1x128xf32> to vector<16x128xf32>
    %27 = arith.addf %24, %26 : vector<16x128xf32>
    %cst_22 = arith.constant 0.000000e+00 : f32
    %28 = vector.broadcast %cst_22 : f32 to vector<16x128xf32>
    %29 = arith.maximumf %27, %28 : vector<16x128xf32>
    %30 = arith.truncf %29 : vector<16x128xf32> to vector<16x128xbf16>
    %c0_23 = arith.constant 0 : index
    %c0_24 = arith.constant 0 : index
    %31 = vector.load %arg10[%c0_23, %c0_24] : memref<128x128xbf16, #tpu.memory_space<vmem>>, vector<128x128xbf16>
    %cst_25 = arith.constant dense<0.000000e+00> : vector<16x128xf32>
    %32 = tpu.matmul %30, %31, %cst_25 {dimension_numbers = #tpu.dot_dimension_numbers<[1], [0], [0], [1], [0, 0, 1, 1], [], []>} : vector<16x128xbf16>, vector<128x128xbf16>, vector<16x128xf32> -> vector<16x128xf32>
    %c0_26 = arith.constant 0 : index
    %c0_27 = arith.constant 0 : index
    %33 = vector.load %arg11[%c0_26, %c0_27] : memref<1x128xf32, #tpu.memory_space<vmem>>, vector<1x128xf32>
    %34 = vector.broadcast %33 : vector<1x128xf32> to vector<16x128xf32>
    %35 = arith.addf %32, %34 : vector<16x128xf32>
    %cst_28 = arith.constant 0.000000e+00 : f32
    %36 = vector.broadcast %cst_28 : f32 to vector<16x128xf32>
    %37 = arith.maximumf %35, %36 : vector<16x128xf32>
    %c0_29 = arith.constant 0 : index
    %c0_30 = arith.constant 0 : index
    %38 = vector.load %arg12[%c0_29, %c0_30] : memref<16x128xf32, #tpu.memory_space<vmem>>, vector<16x128xf32>
    tpu.vector_store %arg12[%c0_29, %c0_30], %37 {strides = array<i32>} : memref<16x128xf32, #tpu.memory_space<vmem>>, vector<16x128xf32>,
    return
  }
  func.func @transform_0(%arg0: i32) -> (i32, i32) {
    %c0_i32 = arith.constant 0 : i32
    %c0_i32_0 = arith.constant 0 : i32
    return %arg0, %c0_i32 : i32, i32
  }
  func.func @transform_1(%arg0: i32) -> (i32, i32) {
    %c0_i32 = arith.constant 0 : i32
    %c0_i32_0 = arith.constant 0 : i32
    return %arg0, %c0_i32 : i32, i32
  }
  func.func @transform_2(%arg0: i32) -> (i32, i32) {
    %c0_i32 = arith.constant 0 : i32
    %c0_i32_0 = arith.constant 0 : i32
    %c0_i32_1 = arith.constant 0 : i32
    return %c0_i32, %c0_i32_0 : i32, i32
  }
  func.func @transform_3(%arg0: i32) -> (i32, i32) {
    %c0_i32 = arith.constant 0 : i32
    %c0_i32_0 = arith.constant 0 : i32
    %c0_i32_1 = arith.constant 0 : i32
    return %c0_i32, %c0_i32_0 : i32, i32
  }
  func.func @transform_4(%arg0: i32) -> (i32, i32) {
    %c0_i32 = arith.constant 0 : i32
    %c0_i32_0 = arith.constant 0 : i32
    %c0_i32_1 = arith.constant 0 : i32
    return %c0_i32, %c0_i32_0 : i32, i32
  }
  func.func @transform_5(%arg0: i32) -> (i32, i32) {
    %c0_i32 = arith.constant 0 : i32
    %c0_i32_0 = arith.constant 0 : i32
    %c0_i32_1 = arith.constant 0 : i32
    return %c0_i32, %c0_i32_0 : i32, i32
  }
  func.func @transform_6(%arg0: i32) -> (i32, i32) {
    %c0_i32 = arith.constant 0 : i32
    %c0_i32_0 = arith.constant 0 : i32
    %c0_i32_1 = arith.constant 0 : i32
    return %c0_i32, %c0_i32_0 : i32, i32
  }
  func.func @transform_7(%arg0: i32) -> (i32, i32) {
    %c0_i32 = arith.constant 0 : i32
    %c0_i32_0 = arith.constant 0 : i32
    %c0_i32_1 = arith.constant 0 : i32
    return %c0_i32, %c0_i32_0 : i32, i32
  }
  func.func @transform_8(%arg0: i32) -> (i32, i32) {
    %c0_i32 = arith.constant 0 : i32
    %c0_i32_0 = arith.constant 0 : i32
    %c0_i32_1 = arith.constant 0 : i32
    return %c0_i32, %c0_i32_0 : i32, i32
  }
  func.func @transform_9(%arg0: i32) -> (i32, i32) {
    %c0_i32 = arith.constant 0 : i32
    %c0_i32_0 = arith.constant 0 : i32
    %c0_i32_1 = arith.constant 0 : i32
    return %c0_i32, %c0_i32_0 : i32, i32
  }
  func.func @transform_10(%arg0: i32) -> (i32, i32) {
    %c0_i32 = arith.constant 0 : i32
    %c0_i32_0 = arith.constant 0 : i32
    %c0_i32_1 = arith.constant 0 : i32
    return %c0_i32, %c0_i32_0 : i32, i32
  }
  func.func @transform_11(%arg0: i32) -> (i32, i32) {
    %c0_i32 = arith.constant 0 : i32
    %c0_i32_0 = arith.constant 0 : i32
    return %arg0, %c0_i32 : i32, i32
  }
}

</mosaic_0001>

<llo_original>
// kernel: gcn_forward.8
$region0: #{gcn_forward.8}
  #allocation0 [shape = 'u32[]', space=smem, size = 0x4, offset = 0x4, fixed_abs, tag = 'smem constant byte address 0x4 - core index']
  #allocation1 [shape = 'u32[144,128]{1,0:T(1,128)}', space=vmem, size = 0x12000, scoped, tag = 'internal scratch']
  %s0 = inlined_call_operand.vmem [shape: f32[16,128], index: 0, kind: input, shape index: {}]
  %s1 = inlined_call_operand.vmem [shape: bf16[128,128], index: 1, kind: input, shape index: {}]
  %s2 = inlined_call_operand.vmem [shape: f32[1,128], index: 2, kind: input, shape index: {}]
  %s3 = inlined_call_operand.vmem [shape: f32[16,128], index: 3, kind: output, shape index: {}]
  %s4 = sld [smem:[#allocation0]]
  $region22: #{gcn_forward.8} parent=0
    _
  %s6 = ssub.s32 1, %s4
  %s7 = scalar_select 0, %s6, %s4
  // Predicated region
  $region2: #{gcn_forward.8} parent=0 // pred_check
    _
  $region3: #{gcn_forward.8} parent=0 // pred_check_branch
    %9 = sbr.rel (0) target = $region5
  $region4: #{gcn_forward.8} parent=0 // pred_region
    _
  $region5: #{gcn_forward.8} parent=0 // pred_fallthru
    _
  // Predicated region
  $region6: #{gcn_forward.8} parent=0 // pred_check
    _
  $region7: #{gcn_forward.8} parent=0 // pred_check_branch
    %11 = sbr.rel (0) target = $region9
  $region8: #{gcn_forward.8} parent=0 // pred_region
    _
  $region9: #{gcn_forward.8} parent=0 // pred_fallthru
    _
  // Predicated region
  $region10: #{gcn_forward.8} parent=0 // pred_check
    _
  $region11: #{gcn_forward.8} parent=0 // pred_check_branch
    %13 = sbr.rel (0) target = $region13
  $region12: #{gcn_forward.8} parent=0 // pred_region
    _
  $region13: #{gcn_forward.8} parent=0 // pred_fallthru
    _
  %v15 = vld [vmem:[%s0] sm:$0xff]
  %v16 = vld [vmem:[%s0 + $0x8] sm:$0xff]
  %v17 = vpack.c.bf16 %v16, %v15
  %v18 = vld [vmem:[%s1] sm:$0xf]
  %v19 = vld [vmem:[%s1 + $0x4] sm:$0xf]
  %v20 = vld [vmem:[%s1 + $0x8] sm:$0xf]
  %v21 = vld [vmem:[%s1 + $0xc] sm:$0xf]
  %v22 = vld [vmem:[%s1 + $0x10] sm:$0xf]
  %v23 = vld [vmem:[%s1 + $0x14] sm:$0xf]
  %v24 = vld [vmem:[%s1 + $0x18] sm:$0xf]
  %v25 = vld [vmem:[%s1 + $0x1c] sm:$0xf]
  %v26 = vld [vmem:[%s1 + $0x20] sm:$0xf]
  %v27 = vld [vmem:[%s1 + $0x24] sm:$0xf]
  %v28 = vld [vmem:[%s1 + $0x28] sm:$0xf]
  %v29 = vld [vmem:[%s1 + $0x2c] sm:$0xf]
  %v30 = vld [vmem:[%s1 + $0x30] sm:$0xf]
  %v31 = vld [vmem:[%s1 + $0x34] sm:$0xf]
  %v32 = vld [vmem:[%s1 + $0x38] sm:$0xf]
  %v33 = vld [vmem:[%s1 + $0x3c] sm:$0xf]
  %v34 = vld [vmem:[%s2] sm:$0x1]
  %v36 = vlaneseq
  %v37 = vshrl.u32 %v36, 7
  %v38 = vsub.s32 0, %v37
  %v39 = vrot.slane %v34, %v38
  %v57 = vunpack.c.l.b16 %v18
  %v58 = vunpack.c.l.b16 %v19
  %v59 = vunpack.c.l.b16 %v20
  %v60 = vunpack.c.l.b16 %v21
  %v61 = vunpack.c.l.b16 %v22
  %v62 = vunpack.c.l.b16 %v23
  %v63 = vunpack.c.l.b16 %v24
  %v64 = vunpack.c.l.b16 %v25
  %v65 = vunpack.c.l.b16 %v26
  %v66 = vunpack.c.l.b16 %v27
  %v67 = vunpack.c.l.b16 %v28
  %v68 = vunpack.c.l.b16 %v29
  %v69 = vunpack.c.l.b16 %v30
  %v70 = vunpack.c.l.b16 %v31
  %v71 = vunpack.c.l.b16 %v32
  %v72 = vunpack.c.l.b16 %v33
  %v73 = vpack.c.b16 %v58, %v57
  %v74 = vpack.c.b16 %v60, %v59
  %v75 = vpack.c.b16 %v62, %v61
  %v76 = vpack.c.b16 %v64, %v63
  %v77 = vpack.c.b16 %v66, %v65
  %v78 = vpack.c.b16 %v68, %v67
  %v79 = vpack.c.b16 %v70, %v69
  %v80 = vpack.c.b16 %v72, %v71
  %89 = vmatprep.subr.bf16.mxu0 0
  %90 = vmatpush1.bf16.msra.mxu0 %v73
  %91 = vmatprep.subr.bf16.mxu0 0
  %92 = vmatpush1.bf16.msra.mxu0 %v74
  %93 = vmatprep.subr.bf16.mxu0 0
  %94 = vmatpush1.bf16.msra.mxu0 %v75
  %95 = vmatprep.subr.bf16.mxu0 0
  %96 = vmatpush1.bf16.msra.mxu0 %v76
  %97 = vmatprep.subr.bf16.mxu0 0
  %98 = vmatpush1.bf16.msra.mxu0 %v77
  %99 = vmatprep.subr.bf16.mxu0 0
  %100 = vmatpush1.bf16.msra.mxu0 %v78
  %101 = vmatprep.subr.bf16.mxu0 0
  %102 = vmatpush1.bf16.msra.mxu0 %v79
  %103 = vmatprep.subr.bf16.mxu0 0
  %104 = vmatpush1.bf16.msra.mxu0 %v80
  %105 = vmatprep.subr.bf16.mxu0 0
  %106 = vmatpush1.bf16.msra.mxu0 0
  %107 = vmatprep.subr.bf16.mxu0 0
  %108 = vmatpush1.bf16.msra.mxu0 0
  %109 = vmatprep.subr.bf16.mxu0 0
  %110 = vmatpush1.bf16.msra.mxu0 0
  %111 = vmatprep.subr.bf16.mxu0 0
  %112 = vmatpush1.bf16.msra.mxu0 0
  %113 = vmatprep.subr.bf16.mxu0 0
  %114 = vmatpush1.bf16.msra.mxu0 0
  %115 = vmatprep.subr.bf16.mxu0 0
  %116 = vmatpush1.bf16.msra.mxu0 0
  %117 = vmatprep.subr.bf16.mxu0 0
  %118 = vmatpush1.bf16.msra.mxu0 0
  %119 = vmatprep.subr.bf16.mxu0 0
  %120 = vmatpush1.bf16.msra.mxu0 0
  %121 = vmatprep.mubr.bf16.mxu0 0
  %122 = vmatmul.mubr.bf16.gmra.mrb[0].mxu0 %v17
  %v123 = vpop.f32.mrb[0].mxu0
  %v124 = vadd.f32 %v39, %v123
  %v125 = vpop.f32.mrb[0].mxu0
  %v126 = vpop.f32.mrb[0].mxu0
  %v127 = vadd.f32 %v39, %v126
  %v128 = vpop.f32.mrb[0].mxu0
  %129 = vdwg.mxu0
  %v130 = vmax.f32 %v124, 0.0
  %v131 = vmax.f32 %v127, 0.0
  %132 = vst [vmem:[%s3] sm:$0xff] %v130
  %133 = vst [vmem:[%s3 + $0x8] sm:$0xff] %v131
  // Predicated region
  $region14: #{gcn_forward.8} parent=0 // pred_check
    _
  $region15: #{gcn_forward.8} parent=0 // pred_check_branch
    %135 = sbr.rel (0) target = $region17
  $region16: #{gcn_forward.8} parent=0 // pred_region
    _
  $region17: #{gcn_forward.8} parent=0 // pred_fallthru
    _
  // Predicated region
  $region18: #{gcn_forward.8} parent=0 // pred_check
    _
  $region19: #{gcn_forward.8} parent=0 // pred_check_branch
    %137 = sbr.rel (0) target = $region21
  $region20: #{gcn_forward.8} parent=0 // pred_region
    _
  $region21: #{gcn_forward.8} parent=0 // pred_fallthru
    _

// kernel: gcn_forward.9
$region0: #{gcn_forward.9}
  #allocation0 [shape = 'u32[]', space=smem, size = 0x4, offset = 0x4, fixed_abs, tag = 'smem constant byte address 0x4 - core index']
  #allocation1 [shape = 'u32[144,128]{1,0:T(1,128)}', space=vmem, size = 0x12000, scoped, tag = 'internal scratch']
  %s0 = inlined_call_operand.vmem [shape: f32[48,128], index: 0, kind: input, shape index: {}]
  %s1 = inlined_call_operand.vmem [shape: f32[48,1], index: 1, kind: input, shape index: {}]
  %s2 = inlined_call_operand.vmem [shape: bf16[128,512], index: 2, kind: input, shape index: {}]
  %s3 = inlined_call_operand.vmem [shape: f32[1,512], index: 3, kind: input, shape index: {}]
  %s4 = inlined_call_operand.vmem [shape: bf16[48,512], index: 4, kind: output, shape index: {}]
  %s5 = sld [smem:[#allocation0]]
  $region26: #{gcn_forward.9} parent=0
    _
  %s7 = ssub.s32 1, %s5
  %s8 = scalar_select 0, %s7, %s5
  // Predicated region
  $region2: #{gcn_forward.9} parent=0 // pred_check
    _
  $region3: #{gcn_forward.9} parent=0 // pred_check_branch
    %10 = sbr.rel (0) target = $region5
  $region4: #{gcn_forward.9} parent=0 // pred_region
    _
  $region5: #{gcn_forward.9} parent=0 // pred_fallthru
    _
  // Predicated region
  $region6: #{gcn_forward.9} parent=0 // pred_check
    _
  $region7: #{gcn_forward.9} parent=0 // pred_check_branch
    %12 = sbr.rel (0) target = $region9
  $region8: #{gcn_forward.9} parent=0 // pred_region
    _
  $region9: #{gcn_forward.9} parent=0 // pred_fallthru
    _
  // Predicated region
  $region10: #{gcn_forward.9} parent=0 // pred_check
    _
  $region11: #{gcn_forward.9} parent=0 // pred_check_branch
    %14 = sbr.rel (0) target = $region13
  $region12: #{gcn_forward.9} parent=0 // pred_region
    _
  $region13: #{gcn_forward.9} parent=0 // pred_fallthru
    _
  // Predicated region
  $region14: #{gcn_forward.9} parent=0 // pred_check
    _
  $region15: #{gcn_forward.9} parent=0 // pred_check_branch
    %16 = sbr.rel (0) target = $region17
  $region16: #{gcn_forward.9} parent=0 // pred_region
    _
  $region17: #{gcn_forward.9} parent=0 // pred_fallthru
    _
  %v18 = vld [vmem:[%s0] sm:$0xff]
  %v19 = vld [vmem:[%s0 + $0x8] sm:$0xff]
  %v20 = vld [vmem:[%s0 + $0x10] sm:$0xff]
  %v21 = vld [vmem:[%s0 + $0x18] sm:$0xff]
  %v22 = vld [vmem:[%s0 + $0x20] sm:$0xff]
  %v23 = vld [vmem:[%s0 + $0x28] sm:$0xff]
  %v24 = vld [vmem:[%s1] sm:$0xff]
  %v25 = vld [vmem:[%s1 + $0x8] sm:$0xff]
  %v26 = vld [vmem:[%s1 + $0x10] sm:$0xff]
  %v27 = vld [vmem:[%s1 + $0x18] sm:$0xff]
  %v28 = vld [vmem:[%s1 + $0x20] sm:$0xff]
  %v29 = vld [vmem:[%s1 + $0x28] sm:$0xff]
  %31 = vset.pattern.permute.xlu0 0
  %32 = vperm.xlu0 %31, %v24
  %v33 = vpop.permute.xlu0 %32
  %36 = vset.pattern.permute.xlu0 0
  %37 = vperm.xlu0 %36, %v25
  %v38 = vpop.permute.xlu0 %37
  %41 = vset.pattern.permute.xlu0 0
  %42 = vperm.xlu0 %41, %v26
  %v43 = vpop.permute.xlu0 %42
  %46 = vset.pattern.permute.xlu0 0
  %47 = vperm.xlu0 %46, %v27
  %v48 = vpop.permute.xlu0 %47
  %51 = vset.pattern.permute.xlu0 0
  %52 = vperm.xlu0 %51, %v28
  %v53 = vpop.permute.xlu0 %52
  %56 = vset.pattern.permute.xlu0 0
  %57 = vperm.xlu0 %56, %v29
  %v58 = vpop.permute.xlu0 %57
  %v60 = vmul.f32 %v18, %v33
  %v61 = vmul.f32 %v19, %v38
  %v62 = vmul.f32 %v20, %v43
  %v63 = vmul.f32 %v21, %v48
  %v64 = vmul.f32 %v22, %v53
  %v65 = vmul.f32 %v23, %v58
  %v66 = vpack.c.bf16 %v61, %v60
  %v67 = vpack.c.bf16 %v63, %v62
  %v68 = vpack.c.bf16 %v65, %v64
  %v69 = vld [vmem:[%s2] sm:$0xff]
  %v70 = vld [vmem:[%s2 + $0x8] sm:$0xff]
  %v71 = vld [vmem:[%s2 + $0x10] sm:$0xff]
  %v72 = vld [vmem:[%s2 + $0x18] sm:$0xff]
  %v73 = vld [vmem:[%s2 + $0x20] sm:$0xff]
  %v74 = vld [vmem:[%s2 + $0x28] sm:$0xff]
  %v75 = vld [vmem:[%s2 + $0x30] sm:$0xff]
  %v76 = vld [vmem:[%s2 + $0x38] sm:$0xff]
  %v77 = vld [vmem:[%s2 + $0x40] sm:$0xff]
  %v78 = vld [vmem:[%s2 + $0x48] sm:$0xff]
  %v79 = vld [vmem:[%s2 + $0x50] sm:$0xff]
  %v80 = vld [vmem:[%s2 + $0x58] sm:$0xff]
  %v81 = vld [vmem:[%s2 + $0x60] sm:$0xff]
  %v82 = vld [vmem:[%s2 + $0x68] sm:$0xff]
  %v83 = vld [vmem:[%s2 + $0x70] sm:$0xff]
  %v84 = vld [vmem:[%s2 + $0x78] sm:$0xff]
  %v85 = vld [vmem:[%s2 + $0x80] sm:$0xff]
  %v86 = vld [vmem:[%s2 + $0x88] sm:$0xff]
  %v87 = vld [vmem:[%s2 + $0x90] sm:$0xff]
  %v88 = vld [vmem:[%s2 + $0x98] sm:$0xff]
  %v89 = vld [vmem:[%s2 + $0xa0] sm:$0xff]
  %v90 = vld [vmem:[%s2 + $0xa8] sm:$0xff]
  %v91 = vld [vmem:[%s2 + $0xb0] sm:$0xff]
  %v92 = vld [vmem:[%s2 + $0xb8] sm:$0xff]
  %v93 = vld [vmem:[%s2 + $0xc0] sm:$0xff]
  %v94 = vld [vmem:[%s2 + $0xc8] sm:$0xff]
  %v95 = vld [vmem:[%s2 + $0xd0] sm:$0xff]
  %v96 = vld [vmem:[%s2 + $0xd8] sm:$0xff]
  %v97 = vld [vmem:[%s2 + $0xe0] sm:$0xff]
  %v98 = vld [vmem:[%s2 + $0xe8] sm:$0xff]
  %v99 = vld [vmem:[%s2 + $0xf0] sm:$0xff]
  %v100 = vld [vmem:[%s2 + $0xf8] sm:$0xff]
  %v101 = vld [vmem:[%s3] sm:$0xf]
  %v103 = vlaneseq
  %v104 = vshrl.u32 %v103, 7
  %v105 = vsub.s32 0, %v104
  %v106 = vrot.slane %v101, %v105
  %v107 = vlaneseq
  %v108 = vshrl.u32 %v107, 7
  %v109 = vsub.s32 1, %v108
  %v110 = vrot.slane %v101, %v109
  %v111 = vlaneseq
  %v112 = vshrl.u32 %v111, 7
  %v113 = vsub.s32 2, %v112
  %v114 = vrot.slane %v101, %v113
  %v115 = vlaneseq
  %v116 = vshrl.u32 %v115, 7
  %v117 = vsub.s32 3, %v116
  %v118 = vrot.slane %v101, %v117
  %v155 = vunpack.c.l.b16 %v69
  %v156 = vunpack.c.h.b16 %v69
  %v157 = vunpack.c.l.b16 %v70
  %v158 = vunpack.c.h.b16 %v70
  %v159 = vunpack.c.l.b16 %v71
  %v160 = vunpack.c.h.b16 %v71
  %v161 = vunpack.c.l.b16 %v72
  %v162 = vunpack.c.h.b16 %v72
  %v163 = vunpack.c.l.b16 %v73
  %v164 = vunpack.c.h.b16 %v73
  %v165 = vunpack.c.l.b16 %v74
  %v166 = vunpack.c.h.b16 %v74
  %v167 = vunpack.c.l.b16 %v75
  %v168 = vunpack.c.h.b16 %v75
  %v169 = vunpack.c.l.b16 %v76
  %v170 = vunpack.c.h.b16 %v76
  %v171 = vunpack.c.l.b16 %v77
  %v172 = vunpack.c.h.b16 %v77
  %v173 = vunpack.c.l.b16 %v78
  %v174 = vunpack.c.h.b16 %v78
  %v175 = vunpack.c.l.b16 %v79
  %v176 = vunpack.c.h.b16 %v79
  %v177 = vunpack.c.l.b16 %v80
  %v178 = vunpack.c.h.b16 %v80
  %v179 = vunpack.c.l.b16 %v81
  %v180 = vunpack.c.h.b16 %v81
  %v181 = vunpack.c.l.b16 %v82
  %v182 = vunpack.c.h.b16 %v82
  %v183 = vunpack.c.l.b16 %v83
  %v184 = vunpack.c.h.b16 %v83
  %v185 = vunpack.c.l.b16 %v84
  %v186 = vunpack.c.h.b16 %v84
  %v187 = vunpack.c.l.b16 %v85
  %v188 = vunpack.c.h.b16 %v85
  %v189 = vunpack.c.l.b16 %v86
  %v190 = vunpack.c.h.b16 %v86
  %v191 = vunpack.c.l.b16 %v87
  %v192 = vunpack.c.h.b16 %v87
  %v193 = vunpack.c.l.b16 %v88
  %v194 = vunpack.c.h.b16 %v88
  %v195 = vunpack.c.l.b16 %v89
  %v196 = vunpack.c.h.b16 %v89
  %v197 = vunpack.c.l.b16 %v90
  %v198 = vunpack.c.h.b16 %v90
  %v199 = vunpack.c.l.b16 %v91
  %v200 = vunpack.c.h.b16 %v91
  %v201 = vunpack.c.l.b16 %v92
  %v202 = vunpack.c.h.b16 %v92
  %v203 = vunpack.c.l.b16 %v93
  %v204 = vunpack.c.h.b16 %v93
  %v205 = vunpack.c.l.b16 %v94
  %v206 = vunpack.c.h.b16 %v94
  %v207 = vunpack.c.l.b16 %v95
  %v208 = vunpack.c.h.b16 %v95
  %v209 = vunpack.c.l.b16 %v96
  %v210 = vunpack.c.h.b16 %v96
  %v211 = vunpack.c.l.b16 %v97
  %v212 = vunpack.c.h.b16 %v97
  %v213 = vunpack.c.l.b16 %v98
  %v214 = vunpack.c.h.b16 %v98
  %v215 = vunpack.c.l.b16 %v99
  %v216 = vunpack.c.h.b16 %v99
  %v217 = vunpack.c.l.b16 %v100
  %v218 = vunpack.c.h.b16 %v100
  %v219 = vpack.c.b16 %v159, %v155
  %v220 = vpack.c.b16 %v160, %v156
  %v221 = vpack.c.b16 %v161, %v157
  %v222 = vpack.c.b16 %v162, %v158
  %v223 = vpack.c.b16 %v167, %v163
  %v224 = vpack.c.b16 %v168, %v164
  %v225 = vpack.c.b16 %v169, %v165
  %v226 = vpack.c.b16 %v170, %v166
  %v227 = vpack.c.b16 %v175, %v171
  %v228 = vpack.c.b16 %v176, %v172
  %v229 = vpack.c.b16 %v177, %v173
  %v230 = vpack.c.b16 %v178, %v174
  %v231 = vpack.c.b16 %v183, %v179
  %v232 = vpack.c.b16 %v184, %v180
  %v233 = vpack.c.b16 %v185, %v181
  %v234 = vpack.c.b16 %v186, %v182
  %v235 = vpack.c.b16 %v191, %v187
  %v236 = vpack.c.b16 %v192, %v188
  %v237 = vpack.c.b16 %v193, %v189
  %v238 = vpack.c.b16 %v194, %v190
  %v239 = vpack.c.b16 %v199, %v195
  %v240 = vpack.c.b16 %v200, %v196
  %v241 = vpack.c.b16 %v201, %v197
  %v242 = vpack.c.b16 %v202, %v198
  %v243 = vpack.c.b16 %v207, %v203
  %v244 = vpack.c.b16 %v208, %v204
  %v245 = vpack.c.b16 %v209, %v205
  %v246 = vpack.c.b16 %v210, %v206
  %v247 = vpack.c.b16 %v215, %v211
  %v248 = vpack.c.b16 %v216, %v212
  %v249 = vpack.c.b16 %v217, %v213
  %v250 = vpack.c.b16 %v218, %v214
  %283 = vmatprep.subr.bf16.mxu0 %v220
  %284 = vmatpush1.bf16.msra.mxu0 %v219
  %285 = vmatprep.subr.bf16.mxu0 %v224
  %286 = vmatpush1.bf16.msra.mxu0 %v223
  %287 = vmatprep.subr.bf16.mxu0 %v228
  %288 = vmatpush1.bf16.msra.mxu0 %v227
  %289 = vmatprep.subr.bf16.mxu0 %v232
  %290 = vmatpush1.bf16.msra.mxu0 %v231
  %291 = vmatprep.subr.bf16.mxu0 %v236
  %292 = vmatpush1.bf16.msra.mxu0 %v235
  %293 = vmatprep.subr.bf16.mxu0 %v240
  %294 = vmatpush1.bf16.msra.mxu0 %v239
  %295 = vmatprep.subr.bf16.mxu0 %v244
  %296 = vmatpush1.bf16.msra.mxu0 %v243
  %297 = vmatprep.subr.bf16.mxu0 %v248
  %298 = vmatpush1.bf16.msra.mxu0 %v247
  %299 = vmatprep.subr.bf16.mxu0 0
  %300 = vmatpush1.bf16.msra.mxu0 0
  %301 = vmatprep.subr.bf16.mxu0 0
  %302 = vmatpush1.bf16.msra.mxu0 0
  %303 = vmatprep.subr.bf16.mxu0 0
  %304 = vmatpush1.bf16.msra.mxu0 0
  %305 = vmatprep.subr.bf16.mxu0 0
  %306 = vmatpush1.bf16.msra.mxu0 0
  %307 = vmatprep.subr.bf16.mxu0 0
  %308 = vmatpush1.bf16.msra.mxu0 0
  %309 = vmatprep.subr.bf16.mxu0 0
  %310 = vmatpush1.bf16.msra.mxu0 0
  %311 = vmatprep.subr.bf16.mxu0 0
  %312 = vmatpush1.bf16.msra.mxu0 0
  %313 = vmatprep.subr.bf16.mxu0 0
  %314 = vmatpush1.bf16.msra.mxu0 0
  %315 = vmatprep.mubr.bf16.mxu0 0
  %316 = vmatmul.mubr.bf16.gmra.mrb[0].mxu0 %v66
  %v317 = vpop.f32.mrb[0].mxu0
  %v318 = vadd.f32 %v106, %v317
  %v319 = vpop.f32.mrb[0].mxu0
  %v320 = vadd.f32 %v110, %v319
  %v321 = vpop.f32.mrb[0].mxu0
  %v322 = vadd.f32 %v106, %v321
  %v323 = vpop.f32.mrb[0].mxu0
  %v324 = vadd.f32 %v110, %v323
  %325 = vmatprep.mubr.bf16.mxu0 0
  %326 = vmatmul.mubr.bf16.gmra.mrb[0].mxu0 %v67
  %v327 = vpop.f32.mrb[0].mxu0
  %v328 = vadd.f32 %v106, %v327
  %v329 = vpop.f32.mrb[0].mxu0
  %v330 = vadd.f32 %v110, %v329
  %v331 = vpop.f32.mrb[0].mxu0
  %v332 = vadd.f32 %v106, %v331
  %v333 = vpop.f32.mrb[0].mxu0
  %v334 = vadd.f32 %v110, %v333
  %335 = vmatprep.mubr.bf16.mxu0 0
  %336 = vmatmul.mubr.bf16.gmra.mrb[0].mxu0 %v68
  %v337 = vpop.f32.mrb[0].mxu0
  %v338 = vadd.f32 %v106, %v337
  %v339 = vpop.f32.mrb[0].mxu0
  %v340 = vadd.f32 %v110, %v339
  %v341 = vpop.f32.mrb[0].mxu0
  %v342 = vadd.f32 %v106, %v341
  %v343 = vpop.f32.mrb[0].mxu0
  %v344 = vadd.f32 %v110, %v343
  %345 = vdwg.mxu0
  %346 = vmatprep.subr.bf16.mxu0 %v222
  %347 = vmatpush1.bf16.msra.mxu0 %v221
  %348 = vmatprep.subr.bf16.mxu0 %v226
  %349 = vmatpush1.bf16.msra.mxu0 %v225
  %350 = vmatprep.subr.bf16.mxu0 %v230
  %351 = vmatpush1.bf16.msra.mxu0 %v229
  %352 = vmatprep.subr.bf16.mxu0 %v234
  %353 = vmatpush1.bf16.msra.mxu0 %v233
  %354 = vmatprep.subr.bf16.mxu0 %v238
  %355 = vmatpush1.bf16.msra.mxu0 %v237
  %356 = vmatprep.subr.bf16.mxu0 %v242
  %357 = vmatpush1.bf16.msra.mxu0 %v241
  %358 = vmatprep.subr.bf16.mxu0 %v246
  %359 = vmatpush1.bf16.msra.mxu0 %v245
  %360 = vmatprep.subr.bf16.mxu0 %v250
  %361 = vmatpush1.bf16.msra.mxu0 %v249
  %362 = vmatprep.subr.bf16.mxu0 0
  %363 = vmatpush1.bf16.msra.mxu0 0
  %364 = vmatprep.subr.bf16.mxu0 0
  %365 = vmatpush1.bf16.msra.mxu0 0
  %366 = vmatprep.subr.bf16.mxu0 0
  %367 = vmatpush1.bf16.msra.mxu0 0
  %368 = vmatprep.subr.bf16.mxu0 0
  %369 = vmatpush1.bf16.msra.mxu0 0
  %370 = vmatprep.subr.bf16.mxu0 0
  %371 = vmatpush1.bf16.msra.mxu0 0
  %372 = vmatprep.subr.bf16.mxu0 0
  %373 = vmatpush1.bf16.msra.mxu0 0
  %374 = vmatprep.subr.bf16.mxu0 0
  %375 = vmatpush1.bf16.msra.mxu0 0
  %376 = vmatprep.subr.bf16.mxu0 0
  %377 = vmatpush1.bf16.msra.mxu0 0
  %378 = vmatprep.mubr.bf16.mxu0 0
  %379 = vmatmul.mubr.bf16.gmra.mrb[0].mxu0 %v66
  %v380 = vpop.f32.mrb[0].mxu0
  %v381 = vadd.f32 %v114, %v380
  %v382 = vpop.f32.mrb[0].mxu0
  %v383 = vadd.f32 %v118, %v382
  %v384 = vpop.f32.mrb[0].mxu0
  %v385 = vadd.f32 %v114, %v384
  %v386 = vpop.f32.mrb[0].mxu0
  %v387 = vadd.f32 %v118, %v386
  %388 = vmatprep.mubr.bf16.mxu0 0
  %389 = vmatmul.mubr.bf16.gmra.mrb[0].mxu0 %v67
  %v390 = vpop.f32.mrb[0].mxu0
  %v391 = vadd.f32 %v114, %v390
  %v392 = vpop.f32.mrb[0].mxu0
  %v393 = vadd.f32 %v118, %v392
  %v394 = vpop.f32.mrb[0].mxu0
  %v395 = vadd.f32 %v114, %v394
  %v396 = vpop.f32.mrb[0].mxu0
  %v397 = vadd.f32 %v118, %v396
  %398 = vmatprep.mubr.bf16.mxu0 0
  %399 = vmatmul.mubr.bf16.gmra.mrb[0].mxu0 %v68
  %v400 = vpop.f32.mrb[0].mxu0
  %v401 = vadd.f32 %v114, %v400
  %v402 = vpop.f32.mrb[0].mxu0
  %v403 = vadd.f32 %v118, %v402
  %v404 = vpop.f32.mrb[0].mxu0
  %v405 = vadd.f32 %v114, %v404
  %v406 = vpop.f32.mrb[0].mxu0
  %v407 = vadd.f32 %v118, %v406
  %408 = vdwg.mxu0
  %v409 = vpack.c.bf16 %v322, %v318
  %v410 = vpack.c.bf16 %v324, %v320
  %v411 = vpack.c.bf16 %v385, %v381
  %v412 = vpack.c.bf16 %v387, %v383
  %v413 = vpack.c.bf16 %v332, %v328
  %v414 = vpack.c.bf16 %v334, %v330
  %v415 = vpack.c.bf16 %v395, %v391
  %v416 = vpack.c.bf16 %v397, %v393
  %v417 = vpack.c.bf16 %v342, %v338
  %v418 = vpack.c.bf16 %v344, %v340
  %v419 = vpack.c.bf16 %v405, %v401
  %v420 = vpack.c.bf16 %v407, %v403
  %v433 = vunpack.c.l.b16 %v409
  %v434 = vunpack.c.l.b16 %v410
  %v435 = vunpack.c.l.b16 %v411
  %v436 = vunpack.c.l.b16 %v412
  %v437 = vunpack.c.h.b16 %v409
  %v438 = vunpack.c.h.b16 %v410
  %v439 = vunpack.c.h.b16 %v411
  %v440 = vunpack.c.h.b16 %v412
  %v441 = vunpack.c.l.b16 %v413
  %v442 = vunpack.c.l.b16 %v414
  %v443 = vunpack.c.l.b16 %v415
  %v444 = vunpack.c.l.b16 %v416
  %v445 = vunpack.c.h.b16 %v413
  %v446 = vunpack.c.h.b16 %v414
  %v447 = vunpack.c.h.b16 %v415
  %v448 = vunpack.c.h.b16 %v416
  %v449 = vunpack.c.l.b16 %v417
  %v450 = vunpack.c.l.b16 %v418
  %v451 = vunpack.c.l.b16 %v419
  %v452 = vunpack.c.l.b16 %v420
  %v453 = vunpack.c.h.b16 %v417
  %v454 = vunpack.c.h.b16 %v418
  %v455 = vunpack.c.h.b16 %v419
  %v456 = vunpack.c.h.b16 %v420
  %v457 = vpack.c.b16 %v434, %v433
  %v458 = vpack.c.b16 %v436, %v435
  %v459 = vpack.c.b16 %v438, %v437
  %v460 = vpack.c.b16 %v440, %v439
  %v461 = vpack.c.b16 %v442, %v441
  %v462 = vpack.c.b16 %v444, %v443
  %v463 = vpack.c.b16 %v446, %v445
  %v464 = vpack.c.b16 %v448, %v447
  %v465 = vpack.c.b16 %v450, %v449
  %v466 = vpack.c.b16 %v452, %v451
  %v467 = vpack.c.b16 %v454, %v453
  %v468 = vpack.c.b16 %v456, %v455
  %481 = vst [vmem:[%s4] sm:$0xff] %v457
  %482 = vst [vmem:[%s4 + $0x8] sm:$0xff] %v458
  %483 = vst [vmem:[%s4 + $0x10] sm:$0xff] %v459
  %484 = vst [vmem:[%s4 + $0x18] sm:$0xff] %v460
  %485 = vst [vmem:[%s4 + $0x20] sm:$0xff] %v461
  %486 = vst [vmem:[%s4 + $0x28] sm:$0xff] %v462
  %487 = vst [vmem:[%s4 + $0x30] sm:$0xff] %v463
  %488 = vst [vmem:[%s4 + $0x38] sm:$0xff] %v464
  %489 = vst [vmem:[%s4 + $0x40] sm:$0xff] %v465
  %490 = vst [vmem:[%s4 + $0x48] sm:$0xff] %v466
  %491 = vst [vmem:[%s4 + $0x50] sm:$0xff] %v467
  %492 = vst [vmem:[%s4 + $0x58] sm:$0xff] %v468
  // Predicated region
  $region18: #{gcn_forward.9} parent=0 // pred_check
    _
  $region19: #{gcn_forward.9} parent=0 // pred_check_branch
    %494 = sbr.rel (0) target = $region21
  $region20: #{gcn_forward.9} parent=0 // pred_region
    _
  $region21: #{gcn_forward.9} parent=0 // pred_fallthru
    _
  // Predicated region
  $region22: #{gcn_forward.9} parent=0 // pred_check
    _
  $region23: #{gcn_forward.9} parent=0 // pred_check_branch
    %496 = sbr.rel (0) target = $region25
  $region24: #{gcn_forward.9} parent=0 // pred_region
    _
  $region25: #{gcn_forward.9} parent=0 // pred_fallthru
    _

// kernel: gcn_forward.11
$region0: #{gcn_forward.11}
  #allocation0 [shape = 'u32[]', space=smem, size = 0x4, offset = 0x4, fixed_abs, tag = 'smem constant byte address 0x4 - core index']
  #allocation1 [shape = 'u32[144,128]{1,0:T(1,128)}', space=vmem, size = 0x12000, scoped, tag = 'internal scratch']
  %s0 = inlined_call_operand.vmem [shape: f32[16,128], index: 0, kind: input, shape index: {}]
  %s1 = inlined_call_operand.vmem [shape: f32[16,128], index: 1, kind: input, shape index: {}]
  %s2 = inlined_call_operand.vmem [shape: bf16[128,128], index: 2, kind: input, shape index: {}]
  %s3 = inlined_call_operand.vmem [shape: bf16[128,128], index: 3, kind: input, shape index: {}]
  %s4 = inlined_call_operand.vmem [shape: f32[1,128], index: 4, kind: input, shape index: {}]
  %s5 = inlined_call_operand.vmem [shape: f32[16,128], index: 5, kind: output, shape index: {}]
  %s6 = sld [smem:[#allocation0]]
  $region30: #{gcn_forward.11} parent=0
    _
  %s8 = ssub.s32 1, %s6
  %s9 = scalar_select 0, %s8, %s6
  // Predicated region
  $region2: #{gcn_forward.11} parent=0 // pred_check
    _
  $region3: #{gcn_forward.11} parent=0 // pred_check_branch
    %11 = sbr.rel (0) target = $region5
  $region4: #{gcn_forward.11} parent=0 // pred_region
    _
  $region5: #{gcn_forward.11} parent=0 // pred_fallthru
    _
  // Predicated region
  $region6: #{gcn_forward.11} parent=0 // pred_check
    _
  $region7: #{gcn_forward.11} parent=0 // pred_check_branch
    %13 = sbr.rel (0) target = $region9
  $region8: #{gcn_forward.11} parent=0 // pred_region
    _
  $region9: #{gcn_forward.11} parent=0 // pred_fallthru
    _
  // Predicated region
  $region10: #{gcn_forward.11} parent=0 // pred_check
    _
  $region11: #{gcn_forward.11} parent=0 // pred_check_branch
    %15 = sbr.rel (0) target = $region13
  $region12: #{gcn_forward.11} parent=0 // pred_region
    _
  $region13: #{gcn_forward.11} parent=0 // pred_fallthru
    _
  // Predicated region
  $region14: #{gcn_forward.11} parent=0 // pred_check
    _
  $region15: #{gcn_forward.11} parent=0 // pred_check_branch
    %17 = sbr.rel (0) target = $region17
  $region16: #{gcn_forward.11} parent=0 // pred_region
    _
  $region17: #{gcn_forward.11} parent=0 // pred_fallthru
    _
  // Predicated region
  $region18: #{gcn_forward.11} parent=0 // pred_check
    _
  $region19: #{gcn_forward.11} parent=0 // pred_check_branch
    %19 = sbr.rel (0) target = $region21
  $region20: #{gcn_forward.11} parent=0 // pred_region
    _
  $region21: #{gcn_forward.11} parent=0 // pred_fallthru
    _
  %v21 = vld [vmem:[%s0] sm:$0xff]
  %v22 = vld [vmem:[%s0 + $0x8] sm:$0xff]
  %v23 = vpack.c.bf16 %v22, %v21
  %v24 = vld [vmem:[%s2] sm:$0xf]
  %v25 = vld [vmem:[%s2 + $0x4] sm:$0xf]
  %v26 = vld [vmem:[%s2 + $0x8] sm:$0xf]
  %v27 = vld [vmem:[%s2 + $0xc] sm:$0xf]
  %v28 = vld [vmem:[%s2 + $0x10] sm:$0xf]
  %v29 = vld [vmem:[%s2 + $0x14] sm:$0xf]
  %v30 = vld [vmem:[%s2 + $0x18] sm:$0xf]
  %v31 = vld [vmem:[%s2 + $0x1c] sm:$0xf]
  %v32 = vld [vmem:[%s2 + $0x20] sm:$0xf]
  %v33 = vld [vmem:[%s2 + $0x24] sm:$0xf]
  %v34 = vld [vmem:[%s2 + $0x28] sm:$0xf]
  %v35 = vld [vmem:[%s2 + $0x2c] sm:$0xf]
  %v36 = vld [vmem:[%s2 + $0x30] sm:$0xf]
  %v37 = vld [vmem:[%s2 + $0x34] sm:$0xf]
  %v38 = vld [vmem:[%s2 + $0x38] sm:$0xf]
  %v39 = vld [vmem:[%s2 + $0x3c] sm:$0xf]
  %v40 = vld [vmem:[%s1] sm:$0xff]
  %v41 = vld [vmem:[%s1 + $0x8] sm:$0xff]
  %v42 = vpack.c.bf16 %v41, %v40
  %v43 = vld [vmem:[%s3] sm:$0xf]
  %v44 = vld [vmem:[%s3 + $0x4] sm:$0xf]
  %v45 = vld [vmem:[%s3 + $0x8] sm:$0xf]
  %v46 = vld [vmem:[%s3 + $0xc] sm:$0xf]
  %v47 = vld [vmem:[%s3 + $0x10] sm:$0xf]
  %v48 = vld [vmem:[%s3 + $0x14] sm:$0xf]
  %v49 = vld [vmem:[%s3 + $0x18] sm:$0xf]
  %v50 = vld [vmem:[%s3 + $0x1c] sm:$0xf]
  %v51 = vld [vmem:[%s3 + $0x20] sm:$0xf]
  %v52 = vld [vmem:[%s3 + $0x24] sm:$0xf]
  %v53 = vld [vmem:[%s3 + $0x28] sm:$0xf]
  %v54 = vld [vmem:[%s3 + $0x2c] sm:$0xf]
  %v55 = vld [vmem:[%s3 + $0x30] sm:$0xf]
  %v56 = vld [vmem:[%s3 + $0x34] sm:$0xf]
  %v57 = vld [vmem:[%s3 + $0x38] sm:$0xf]
  %v58 = vld [vmem:[%s3 + $0x3c] sm:$0xf]
  %v75 = vunpack.c.l.b16 %v43
  %v76 = vunpack.c.l.b16 %v44
  %v77 = vunpack.c.l.b16 %v45
  %v78 = vunpack.c.l.b16 %v46
  %v79 = vunpack.c.l.b16 %v47
  %v80 = vunpack.c.l.b16 %v48
  %v81 = vunpack.c.l.b16 %v49
  %v82 = vunpack.c.l.b16 %v50
  %v83 = vunpack.c.l.b16 %v51
  %v84 = vunpack.c.l.b16 %v52
  %v85 = vunpack.c.l.b16 %v53
  %v86 = vunpack.c.l.b16 %v54
  %v87 = vunpack.c.l.b16 %v55
  %v88 = vunpack.c.l.b16 %v56
  %v89 = vunpack.c.l.b16 %v57
  %v90 = vunpack.c.l.b16 %v58
  %v91 = vpack.c.b16 %v76, %v75
  %v92 = vpack.c.b16 %v78, %v77
  %v93 = vpack.c.b16 %v80, %v79
  %v94 = vpack.c.b16 %v82, %v81
  %v95 = vpack.c.b16 %v84, %v83
  %v96 = vpack.c.b16 %v86, %v85
  %v97 = vpack.c.b16 %v88, %v87
  %v98 = vpack.c.b16 %v90, %v89
  %107 = vmatprep.subr.bf16.mxu0 0
  %108 = vmatpush1.bf16.msra.mxu0 %v91
  %109 = vmatprep.subr.bf16.mxu0 0
  %110 = vmatpush1.bf16.msra.mxu0 %v92
  %111 = vmatprep.subr.bf16.mxu0 0
  %112 = vmatpush1.bf16.msra.mxu0 %v93
  %113 = vmatprep.subr.bf16.mxu0 0
  %114 = vmatpush1.bf16.msra.mxu0 %v94
  %115 = vmatprep.subr.bf16.mxu0 0
  %116 = vmatpush1.bf16.msra.mxu0 %v95
  %117 = vmatprep.subr.bf16.mxu0 0
  %118 = vmatpush1.bf16.msra.mxu0 %v96
  %119 = vmatprep.subr.bf16.mxu0 0
  %120 = vmatpush1.bf16.msra.mxu0 %v97
  %121 = vmatprep.subr.bf16.mxu0 0
  %122 = vmatpush1.bf16.msra.mxu0 %v98
  %123 = vmatprep.subr.bf16.mxu0 0
  %124 = vmatpush1.bf16.msra.mxu0 0
  %125 = vmatprep.subr.bf16.mxu0 0
  %126 = vmatpush1.bf16.msra.mxu0 0
  %127 = vmatprep.subr.bf16.mxu0 0
  %128 = vmatpush1.bf16.msra.mxu0 0
  %129 = vmatprep.subr.bf16.mxu0 0
  %130 = vmatpush1.bf16.msra.mxu0 0
  %131 = vmatprep.subr.bf16.mxu0 0
  %132 = vmatpush1.bf16.msra.mxu0 0
  %133 = vmatprep.subr.bf16.mxu0 0
  %134 = vmatpush1.bf16.msra.mxu0 0
  %135 = vmatprep.subr.bf16.mxu0 0
  %136 = vmatpush1.bf16.msra.mxu0 0
  %137 = vmatprep.subr.bf16.mxu0 0
  %138 = vmatpush1.bf16.msra.mxu0 0
  %139 = vmatprep.mubr.bf16.mxu0 0
  %140 = vmatmul.mubr.bf16.gmra.mrb[0].mxu0 %v42
  %v141 = vpop.f32.mrb[0].mxu0
  %v142 = vadd.f32 0.0, %v141
  %v143 = vpop.f32.mrb[0].mxu0
  %v144 = vpop.f32.mrb[0].mxu0
  %v145 = vadd.f32 0.0, %v144
  %v146 = vpop.f32.mrb[0].mxu0
  %147 = vdwg.mxu0
  %v164 = vunpack.c.l.b16 %v24
  %v165 = vunpack.c.l.b16 %v25
  %v166 = vunpack.c.l.b16 %v26
  %v167 = vunpack.c.l.b16 %v27
  %v168 = vunpack.c.l.b16 %v28
  %v169 = vunpack.c.l.b16 %v29
  %v170 = vunpack.c.l.b16 %v30
  %v171 = vunpack.c.l.b16 %v31
  %v172 = vunpack.c.l.b16 %v32
  %v173 = vunpack.c.l.b16 %v33
  %v174 = vunpack.c.l.b16 %v34
  %v175 = vunpack.c.l.b16 %v35
  %v176 = vunpack.c.l.b16 %v36
  %v177 = vunpack.c.l.b16 %v37
  %v178 = vunpack.c.l.b16 %v38
  %v179 = vunpack.c.l.b16 %v39
  %v180 = vpack.c.b16 %v165, %v164
  %v181 = vpack.c.b16 %v167, %v166
  %v182 = vpack.c.b16 %v169, %v168
  %v183 = vpack.c.b16 %v171, %v170
  %v184 = vpack.c.b16 %v173, %v172
  %v185 = vpack.c.b16 %v175, %v174
  %v186 = vpack.c.b16 %v177, %v176
  %v187 = vpack.c.b16 %v179, %v178
  %196 = vmatprep.subr.bf16.mxu0 0
  %197 = vmatpush1.bf16.msra.mxu0 %v180
  %198 = vmatprep.subr.bf16.mxu0 0
  %199 = vmatpush1.bf16.msra.mxu0 %v181
  %200 = vmatprep.subr.bf16.mxu0 0
  %201 = vmatpush1.bf16.msra.mxu0 %v182
  %202 = vmatprep.subr.bf16.mxu0 0
  %203 = vmatpush1.bf16.msra.mxu0 %v183
  %204 = vmatprep.subr.bf16.mxu0 0
  %205 = vmatpush1.bf16.msra.mxu0 %v184
  %206 = vmatprep.subr.bf16.mxu0 0
  %207 = vmatpush1.bf16.msra.mxu0 %v185
  %208 = vmatprep.subr.bf16.mxu0 0
  %209 = vmatpush1.bf16.msra.mxu0 %v186
  %210 = vmatprep.subr.bf16.mxu0 0
  %211 = vmatpush1.bf16.msra.mxu0 %v187
  %212 = vmatprep.subr.bf16.mxu0 0
  %213 = vmatpush1.bf16.msra.mxu0 0
  %214 = vmatprep.subr.bf16.mxu0 0
  %215 = vmatpush1.bf16.msra.mxu0 0
  %216 = vmatprep.subr.bf16.mxu0 0
  %217 = vmatpush1.bf16.msra.mxu0 0
  %218 = vmatprep.subr.bf16.mxu0 0
  %219 = vmatpush1.bf16.msra.mxu0 0
  %220 = vmatprep.subr.bf16.mxu0 0
  %221 = vmatpush1.bf16.msra.mxu0 0
  %222 = vmatprep.subr.bf16.mxu0 0
  %223 = vmatpush1.bf16.msra.mxu0 0
  %224 = vmatprep.subr.bf16.mxu0 0
  %225 = vmatpush1.bf16.msra.mxu0 0
  %226 = vmatprep.subr.bf16.mxu0 0
  %227 = vmatpush1.bf16.msra.mxu0 0
  %228 = vmatprep.mubr.bf16.mxu0 0
  %229 = vmatmul.mubr.bf16.gmra.mrb[0].mxu0 %v23
  %v230 = vpop.f32.mrb[0].mxu0
  %v231 = vadd.f32 %v142, %v230
  %v232 = vpop.f32.mrb[0].mxu0
  %v233 = vpop.f32.mrb[0].mxu0
  %v234 = vadd.f32 %v145, %v233
  %v235 = vpop.f32.mrb[0].mxu0
  %236 = vdwg.mxu0
  %v237 = vld [vmem:[%s4] sm:$0x1]
  %v239 = vlaneseq
  %v240 = vshrl.u32 %v239, 7
  %v241 = vsub.s32 0, %v240
  %v242 = vrot.slane %v237, %v241
  %v244 = vadd.f32 %v231, %v242
  %v245 = vadd.f32 %v234, %v242
  %v246 = vmax.f32 %v244, 0.0
  %v247 = vmax.f32 %v245, 0.0
  %248 = vst [vmem:[%s5] sm:$0xff] %v246
  %249 = vst [vmem:[%s5 + $0x8] sm:$0xff] %v247
  // Predicated region
  $region22: #{gcn_forward.11} parent=0 // pred_check
    _
  $region23: #{gcn_forward.11} parent=0 // pred_check_branch
    %251 = sbr.rel (0) target = $region25
  $region24: #{gcn_forward.11} parent=0 // pred_region
    _
  $region25: #{gcn_forward.11} parent=0 // pred_fallthru
    _
  // Predicated region
  $region26: #{gcn_forward.11} parent=0 // pred_check
    _
  $region27: #{gcn_forward.11} parent=0 // pred_check_branch
    %253 = sbr.rel (0) target = $region29
  $region28: #{gcn_forward.11} parent=0 // pred_region
    _
  $region29: #{gcn_forward.11} parent=0 // pred_fallthru
    _

// kernel: gcn_forward.10
$region0: #{gcn_forward.10}
  #allocation0 [shape = 'u32[]', space=smem, size = 0x4, offset = 0x4, fixed_abs, tag = 'smem constant byte address 0x4 - core index']
  #allocation1 [shape = 'u32[144,128]{1,0:T(1,128)}', space=vmem, size = 0x12000, scoped, tag = 'internal scratch']
  %s0 = inlined_call_operand.vmem [shape: bf16[3,16,512], index: 0, kind: input, shape index: {}]
  %s1 = inlined_call_operand.vmem [shape: bf16[128,512], index: 1, kind: input, shape index: {}]
  %s2 = inlined_call_operand.vmem [shape: f32[16,128], index: 2, kind: output, shape index: {}]
  %s3 = sld [smem:[#allocation0]]
  $region18: #{gcn_forward.10} parent=0
    _
  %s5 = ssub.s32 1, %s3
  %s6 = scalar_select 0, %s5, %s3
  // Predicated region
  $region2: #{gcn_forward.10} parent=0 // pred_check
    _
  $region3: #{gcn_forward.10} parent=0 // pred_check_branch
    %8 = sbr.rel (0) target = $region5
  $region4: #{gcn_forward.10} parent=0 // pred_region
    _
  $region5: #{gcn_forward.10} parent=0 // pred_fallthru
    _
  // Predicated region
  $region6: #{gcn_forward.10} parent=0 // pred_check
    _
  $region7: #{gcn_forward.10} parent=0 // pred_check_branch
    %10 = sbr.rel (0) target = $region9
  $region8: #{gcn_forward.10} parent=0 // pred_region
    _
  $region9: #{gcn_forward.10} parent=0 // pred_fallthru
    _
  %v12 = vld [vmem:[%s0] sm:$0xff]
  %v13 = vld [vmem:[%s0 + $0x8] sm:$0xff]
  %v14 = vld [vmem:[%s0 + $0x10] sm:$0xff]
  %v15 = vld [vmem:[%s0 + $0x18] sm:$0xff]
  %v16 = vunpack.c.l.bf16 %v12
  %v17 = vunpack.c.h.bf16 %v12
  %v18 = vunpack.c.l.bf16 %v13
  %v19 = vunpack.c.h.bf16 %v13
  %v20 = vunpack.c.l.bf16 %v14
  %v21 = vunpack.c.h.bf16 %v14
  %v22 = vunpack.c.l.bf16 %v15
  %v23 = vunpack.c.h.bf16 %v15
  %v24 = vld [vmem:[%s1] sm:$0xff]
  %v25 = vld [vmem:[%s1 + $0x8] sm:$0xff]
  %v26 = vld [vmem:[%s1 + $0x10] sm:$0xff]
  %v27 = vld [vmem:[%s1 + $0x18] sm:$0xff]
  %v28 = vld [vmem:[%s1 + $0x20] sm:$0xff]
  %v29 = vld [vmem:[%s1 + $0x28] sm:$0xff]
  %v30 = vld [vmem:[%s1 + $0x30] sm:$0xff]
  %v31 = vld [vmem:[%s1 + $0x38] sm:$0xff]
  %v32 = vld [vmem:[%s1 + $0x40] sm:$0xff]
  %v33 = vld [vmem:[%s1 + $0x48] sm:$0xff]
  %v34 = vld [vmem:[%s1 + $0x50] sm:$0xff]
  %v35 = vld [vmem:[%s1 + $0x58] sm:$0xff]
  %v36 = vld [vmem:[%s1 + $0x60] sm:$0xff]
  %v37 = vld [vmem:[%s1 + $0x68] sm:$0xff]
  %v38 = vld [vmem:[%s1 + $0x70] sm:$0xff]
  %v39 = vld [vmem:[%s1 + $0x78] sm:$0xff]
  %v40 = vld [vmem:[%s1 + $0x80] sm:$0xff]
  %v41 = vld [vmem:[%s1 + $0x88] sm:$0xff]
  %v42 = vld [vmem:[%s1 + $0x90] sm:$0xff]
  %v43 = vld [vmem:[%s1 + $0x98] sm:$0xff]
  %v44 = vld [vmem:[%s1 + $0xa0] sm:$0xff]
  %v45 = vld [vmem:[%s1 + $0xa8] sm:$0xff]
  %v46 = vld [vmem:[%s1 + $0xb0] sm:$0xff]
  %v47 = vld [vmem:[%s1 + $0xb8] sm:$0xff]
  %v48 = vld [vmem:[%s1 + $0xc0] sm:$0xff]
  %v49 = vld [vmem:[%s1 + $0xc8] sm:$0xff]
  %v50 = vld [vmem:[%s1 + $0xd0] sm:$0xff]
  %v51 = vld [vmem:[%s1 + $0xd8] sm:$0xff]
  %v52 = vld [vmem:[%s1 + $0xe0] sm:$0xff]
  %v53 = vld [vmem:[%s1 + $0xe8] sm:$0xff]
  %v54 = vld [vmem:[%s1 + $0xf0] sm:$0xff]
  %v55 = vld [vmem:[%s1 + $0xf8] sm:$0xff]
  %v88 = vunpack.c.l.b16 %v24
  %v89 = vunpack.c.h.b16 %v24
  %v90 = vunpack.c.l.b16 %v25
  %v91 = vunpack.c.h.b16 %v25
  %v92 = vunpack.c.l.b16 %v26
  %v93 = vunpack.c.h.b16 %v26
  %v94 = vunpack.c.l.b16 %v27
  %v95 = vunpack.c.h.b16 %v27
  %v96 = vunpack.c.l.b16 %v28
  %v97 = vunpack.c.h.b16 %v28
  %v98 = vunpack.c.l.b16 %v29
  %v99 = vunpack.c.h.b16 %v29
  %v100 = vunpack.c.l.b16 %v30
  %v101 = vunpack.c.h.b16 %v30
  %v102 = vunpack.c.l.b16 %v31
  %v103 = vunpack.c.h.b16 %v31
  %v104 = vunpack.c.l.b16 %v32
  %v105 = vunpack.c.h.b16 %v32
  %v106 = vunpack.c.l.b16 %v33
  %v107 = vunpack.c.h.b16 %v33
  %v108 = vunpack.c.l.b16 %v34
  %v109 = vunpack.c.h.b16 %v34
  %v110 = vunpack.c.l.b16 %v35
  %v111 = vunpack.c.h.b16 %v35
  %v112 = vunpack.c.l.b16 %v36
  %v113 = vunpack.c.h.b16 %v36
  %v114 = vunpack.c.l.b16 %v37
  %v115 = vunpack.c.h.b16 %v37
  %v116 = vunpack.c.l.b16 %v38
  %v117 = vunpack.c.h.b16 %v38
  %v118 = vunpack.c.l.b16 %v39
  %v119 = vunpack.c.h.b16 %v39
  %v120 = vunpack.c.l.b16 %v40
  %v121 = vunpack.c.h.b16 %v40
  %v122 = vunpack.c.l.b16 %v41
  %v123 = vunpack.c.h.b16 %v41
  %v124 = vunpack.c.l.b16 %v42
  %v125 = vunpack.c.h.b16 %v42
  %v126 = vunpack.c.l.b16 %v43
  %v127 = vunpack.c.h.b16 %v43
  %v128 = vunpack.c.l.b16 %v44
  %v129 = vunpack.c.h.b16 %v44
  %v130 = vunpack.c.l.b16 %v45
  %v131 = vunpack.c.h.b16 %v45
  %v132 = vunpack.c.l.b16 %v46
  %v133 = vunpack.c.h.b16 %v46
  %v134 = vunpack.c.l.b16 %v47
  %v135 = vunpack.c.h.b16 %v47
  %v136 = vunpack.c.l.b16 %v48
  %v137 = vunpack.c.h.b16 %v48
  %v138 = vunpack.c.l.b16 %v49
  %v139 = vunpack.c.h.b16 %v49
  %v140 = vunpack.c.l.b16 %v50
  %v141 = vunpack.c.h.b16 %v50
  %v142 = vunpack.c.l.b16 %v51
  %v143 = vunpack.c.h.b16 %v51
  %v144 = vunpack.c.l.b16 %v52
  %v145 = vunpack.c.h.b16 %v52
  %v146 = vunpack.c.l.b16 %v53
  %v147 = vunpack.c.h.b16 %v53
  %v148 = vunpack.c.l.b16 %v54
  %v149 = vunpack.c.h.b16 %v54
  %v150 = vunpack.c.l.b16 %v55
  %v151 = vunpack.c.h.b16 %v55
  %v152 = vpack.c.b16 %v92, %v88
  %v153 = vpack.c.b16 %v93, %v89
  %v154 = vpack.c.b16 %v94, %v90
  %v155 = vpack.c.b16 %v95, %v91
  %v156 = vpack.c.b16 %v100, %v96
  %v157 = vpack.c.b16 %v101, %v97
  %v158 = vpack.c.b16 %v102, %v98
  %v159 = vpack.c.b16 %v103, %v99
  %v160 = vpack.c.b16 %v108, %v104
  %v161 = vpack.c.b16 %v109, %v105
  %v162 = vpack.c.b16 %v110, %v106
  %v163 = vpack.c.b16 %v111, %v107
  %v164 = vpack.c.b16 %v116, %v112
  %v165 = vpack.c.b16 %v117, %v113
  %v166 = vpack.c.b16 %v118, %v114
  %v167 = vpack.c.b16 %v119, %v115
  %v168 = vpack.c.b16 %v124, %v120
  %v169 = vpack.c.b16 %v125, %v121
  %v170 = vpack.c.b16 %v126, %v122
  %v171 = vpack.c.b16 %v127, %v123
  %v172 = vpack.c.b16 %v132, %v128
  %v173 = vpack.c.b16 %v133, %v129
  %v174 = vpack.c.b16 %v134, %v130
  %v175 = vpack.c.b16 %v135, %v131
  %v176 = vpack.c.b16 %v140, %v136
  %v177 = vpack.c.b16 %v141, %v137
  %v178 = vpack.c.b16 %v142, %v138
  %v179 = vpack.c.b16 %v143, %v139
  %v180 = vpack.c.b16 %v148, %v144
  %v181 = vpack.c.b16 %v149, %v145
  %v182 = vpack.c.b16 %v150, %v146
  %v183 = vpack.c.b16 %v151, %v147
  %216 = vmatprep.subr.bf16.mxu0 %v153
  %217 = vmatpush1.bf16.msra.mxu0 %v152
  %218 = vmatprep.subr.bf16.mxu0 %v157
  %219 = vmatpush1.bf16.msra.mxu0 %v156
  %220 = vmatprep.subr.bf16.mxu0 %v161
  %221 = vmatpush1.bf16.msra.mxu0 %v160
  %222 = vmatprep.subr.bf16.mxu0 %v165
  %223 = vmatpush1.bf16.msra.mxu0 %v164
  %224 = vmatprep.subr.bf16.mxu0 %v169
  %225 = vmatpush1.bf16.msra.mxu0 %v168
  %226 = vmatprep.subr.bf16.mxu0 %v173
  %227 = vmatpush1.bf16.msra.mxu0 %v172
  %228 = vmatprep.subr.bf16.mxu0 %v177
  %229 = vmatpush1.bf16.msra.mxu0 %v176
  %230 = vmatprep.subr.bf16.mxu0 %v181
  %231 = vmatpush1.bf16.msra.mxu0 %v180
  %232 = vmatprep.subr.bf16.mxu0 0
  %233 = vmatpush1.bf16.msra.mxu0 0
  %234 = vmatprep.subr.bf16.mxu0 0
  %235 = vmatpush1.bf16.msra.mxu0 0
  %236 = vmatprep.subr.bf16.mxu0 0
  %237 = vmatpush1.bf16.msra.mxu0 0
  %238 = vmatprep.subr.bf16.mxu0 0
  %239 = vmatpush1.bf16.msra.mxu0 0
  %240 = vmatprep.subr.bf16.mxu0 0
  %241 = vmatpush1.bf16.msra.mxu0 0
  %242 = vmatprep.subr.bf16.mxu0 0
  %243 = vmatpush1.bf16.msra.mxu0 0
  %244 = vmatprep.subr.bf16.mxu0 0
  %245 = vmatpush1.bf16.msra.mxu0 0
  %246 = vmatprep.subr.bf16.mxu0 0
  %247 = vmatpush1.bf16.msra.mxu0 0
  %248 = vmatprep.mubr.bf16.mxu0 0
  %249 = vmatmul.mubr.bf16.gmra.mrb[0].mxu0 0
  %v250 = vpop.f32.mrb[0].mxu0
  %v251 = vadd.f32 0.0, %v250
  %v252 = vpop.f32.mrb[0].mxu0
  %v253 = vadd.f32 0.0, %v252
  %v254 = vpop.f32.mrb[0].mxu0
  %v255 = vadd.f32 0.0, %v254
  %v256 = vpop.f32.mrb[0].mxu0
  %v257 = vadd.f32 0.0, %v256
  %258 = vdwg.mxu0
  %259 = vmatprep.subr.bf16.mxu0 %v155
  %260 = vmatpush1.bf16.msra.mxu0 %v154
  %261 = vmatprep.subr.bf16.mxu0 %v159
  %262 = vmatpush1.bf16.msra.mxu0 %v158
  %263 = vmatprep.subr.bf16.mxu0 %v163
  %264 = vmatpush1.bf16.msra.mxu0 %v162
  %265 = vmatprep.subr.bf16.mxu0 %v167
  %266 = vmatpush1.bf16.msra.mxu0 %v166
  %267 = vmatprep.subr.bf16.mxu0 %v171
  %268 = vmatpush1.bf16.msra.mxu0 %v170
  %269 = vmatprep.subr.bf16.mxu0 %v175
  %270 = vmatpush1.bf16.msra.mxu0 %v174
  %271 = vmatprep.subr.bf16.mxu0 %v179
  %272 = vmatpush1.bf16.msra.mxu0 %v178
  %273 = vmatprep.subr.bf16.mxu0 %v183
  %274 = vmatpush1.bf16.msra.mxu0 %v182
  %275 = vmatprep.subr.bf16.mxu0 0
  %276 = vmatpush1.bf16.msra.mxu0 0
  %277 = vmatprep.subr.bf16.mxu0 0
  %278 = vmatpush1.bf16.msra.mxu0 0
  %279 = vmatprep.subr.bf16.mxu0 0
  %280 = vmatpush1.bf16.msra.mxu0 0
  %281 = vmatprep.subr.bf16.mxu0 0
  %282 = vmatpush1.bf16.msra.mxu0 0
  %283 = vmatprep.subr.bf16.mxu0 0
  %284 = vmatpush1.bf16.msra.mxu0 0
  %285 = vmatprep.subr.bf16.mxu0 0
  %286 = vmatpush1.bf16.msra.mxu0 0
  %287 = vmatprep.subr.bf16.mxu0 0
  %288 = vmatpush1.bf16.msra.mxu0 0
  %289 = vmatprep.subr.bf16.mxu0 0
  %290 = vmatpush1.bf16.msra.mxu0 0
  %291 = vmatprep.mubr.bf16.mxu0 0
  %292 = vmatmul.mubr.bf16.gmra.mrb[0].mxu0 0
  %v293 = vpop.f32.mrb[0].mxu0
  %v294 = vadd.f32 0.0, %v293
  %v295 = vpop.f32.mrb[0].mxu0
  %v296 = vadd.f32 0.0, %v295
  %v297 = vpop.f32.mrb[0].mxu0
  %v298 = vadd.f32 0.0, %v297
  %v299 = vpop.f32.mrb[0].mxu0
  %v300 = vadd.f32 0.0, %v299
  %301 = vdwg.mxu0
  %v302 = vadd.f32 %v16, %v251
  %v303 = vadd.f32 %v17, %v253
  %v304 = vadd.f32 %v18, %v294
  %v305 = vadd.f32 %v19, %v296
  %v306 = vadd.f32 %v20, %v255
  %v307 = vadd.f32 %v21, %v257
  %v308 = vadd.f32 %v22, %v298
  %v309 = vadd.f32 %v23, %v300
  %v310 = vxor.u32 %v302, 2147483648
  %v311 = vxor.u32 %v306, 2147483648
  %v312 = vmul.f32 %v310, 1.442695
  %v313 = vpow.pop %v312
  %v314 = vmul.f32 %v311, 1.442695
  %v315 = vpow.pop %v314
  %v316 = vadd.f32 %v313, 1.0
  %v317 = vadd.f32 %v315, 1.0
  %v318 = vrcp.pop %v316
  %v319 = vmul.f32 1.0, %v318
  %v320 = vrcp.pop %v317
  %v321 = vmul.f32 1.0, %v320
  %v322 = vxor.u32 %v303, 2147483648
  %v323 = vxor.u32 %v307, 2147483648
  %v324 = vmul.f32 %v322, 1.442695
  %v325 = vpow.pop %v324
  %v326 = vmul.f32 %v323, 1.442695
  %v327 = vpow.pop %v326
  %v328 = vadd.f32 %v325, 1.0
  %v329 = vadd.f32 %v327, 1.0
  %v330 = vrcp.pop %v328
  %v331 = vmul.f32 1.0, %v330
  %v332 = vrcp.pop %v329
  %v333 = vmul.f32 1.0, %v332
  %v334 = vtanh.pop %v304
  %v335 = vtanh.pop %v308
  %v336 = vxor.u32 %v305, 2147483648
  %v337 = vxor.u32 %v309, 2147483648
  %v338 = vmul.f32 %v336, 1.442695
  %v339 = vpow.pop %v338
  %v340 = vmul.f32 %v337, 1.442695
  %v341 = vpow.pop %v340
  %v342 = vadd.f32 %v339, 1.0
  %v343 = vadd.f32 %v341, 1.0
  %v344 = vrcp.pop %v342
  %v345 = vmul.f32 1.0, %v344
  %v346 = vrcp.pop %v343
  %v347 = vmul.f32 1.0, %v346
  %v348 = vmul.f32 %v331, 0.0
  %v349 = vmul.f32 %v333, 0.0
  %v350 = vmul.f32 %v319, %v334
  %v351 = vmul.f32 %v321, %v335
  %v352 = vadd.f32 %v348, %v350
  %v353 = vadd.f32 %v349, %v351
  %v354 = vtanh.pop %v352
  %v355 = vtanh.pop %v353
  %v356 = vmul.f32 %v345, %v354
  %v357 = vmul.f32 %v347, %v355
  %s358 = scalar_lea.vmem %s0, 32
  %v359 = vld [vmem:[%s358] sm:$0xff]
  %v360 = vld [vmem:[%s358 + $0x8] sm:$0xff]
  %v361 = vld [vmem:[%s358 + $0x10] sm:$0xff]
  %v362 = vld [vmem:[%s358 + $0x18] sm:$0xff]
  %v363 = vunpack.c.l.bf16 %v359
  %v364 = vunpack.c.h.bf16 %v359
  %v365 = vunpack.c.l.bf16 %v360
  %v366 = vunpack.c.h.bf16 %v360
  %v367 = vunpack.c.l.bf16 %v361
  %v368 = vunpack.c.h.bf16 %v361
  %v369 = vunpack.c.l.bf16 %v362
  %v370 = vunpack.c.h.bf16 %v362
  %v371 = vpack.c.bf16 %v357, %v356
  %372 = vmatprep.subr.bf16.mxu0 %v153
  %373 = vmatpush1.bf16.msra.mxu0 %v152
  %374 = vmatprep.subr.bf16.mxu0 %v157
  %375 = vmatpush1.bf16.msra.mxu0 %v156
  %376 = vmatprep.subr.bf16.mxu0 %v161
  %377 = vmatpush1.bf16.msra.mxu0 %v160
  %378 = vmatprep.subr.bf16.mxu0 %v165
  %379 = vmatpush1.bf16.msra.mxu0 %v164
  %380 = vmatprep.subr.bf16.mxu0 %v169
  %381 = vmatpush1.bf16.msra.mxu0 %v168
  %382 = vmatprep.subr.bf16.mxu0 %v173
  %383 = vmatpush1.bf16.msra.mxu0 %v172
  %384 = vmatprep.subr.bf16.mxu0 %v177
  %385 = vmatpush1.bf16.msra.mxu0 %v176
  %386 = vmatprep.subr.bf16.mxu0 %v181
  %387 = vmatpush1.bf16.msra.mxu0 %v180
  %388 = vmatprep.subr.bf16.mxu0 0
  %389 = vmatpush1.bf16.msra.mxu0 0
  %390 = vmatprep.subr.bf16.mxu0 0
  %391 = vmatpush1.bf16.msra.mxu0 0
  %392 = vmatprep.subr.bf16.mxu0 0
  %393 = vmatpush1.bf16.msra.mxu0 0
  %394 = vmatprep.subr.bf16.mxu0 0
  %395 = vmatpush1.bf16.msra.mxu0 0
  %396 = vmatprep.subr.bf16.mxu0 0
  %397 = vmatpush1.bf16.msra.mxu0 0
  %398 = vmatprep.subr.bf16.mxu0 0
  %399 = vmatpush1.bf16.msra.mxu0 0
  %400 = vmatprep.subr.bf16.mxu0 0
  %401 = vmatpush1.bf16.msra.mxu0 0
  %402 = vmatprep.subr.bf16.mxu0 0
  %403 = vmatpush1.bf16.msra.mxu0 0
  %404 = vmatprep.mubr.bf16.mxu0 0
  %405 = vmatmul.mubr.bf16.gmra.mrb[0].mxu0 %v371
  %v406 = vpop.f32.mrb[0].mxu0
  %v407 = vadd.f32 0.0, %v406
  %v408 = vpop.f32.mrb[0].mxu0
  %v409 = vadd.f32 0.0, %v408
  %v410 = vpop.f32.mrb[0].mxu0
  %v411 = vadd.f32 0.0, %v410
  %v412 = vpop.f32.mrb[0].mxu0
  %v413 = vadd.f32 0.0, %v412
  %414 = vdwg.mxu0
  %415 = vmatprep.subr.bf16.mxu0 %v155
  %416 = vmatpush1.bf16.msra.mxu0 %v154
  %417 = vmatprep.subr.bf16.mxu0 %v159
  %418 = vmatpush1.bf16.msra.mxu0 %v158
  %419 = vmatprep.subr.bf16.mxu0 %v163
  %420 = vmatpush1.bf16.msra.mxu0 %v162
  %421 = vmatprep.subr.bf16.mxu0 %v167
  %422 = vmatpush1.bf16.msra.mxu0 %v166
  %423 = vmatprep.subr.bf16.mxu0 %v171
  %424 = vmatpush1.bf16.msra.mxu0 %v170
  %425 = vmatprep.subr.bf16.mxu0 %v175
  %426 = vmatpush1.bf16.msra.mxu0 %v174
  %427 = vmatprep.subr.bf16.mxu0 %v179
  %428 = vmatpush1.bf16.msra.mxu0 %v178
  %429 = vmatprep.subr.bf16.mxu0 %v183
  %430 = vmatpush1.bf16.msra.mxu0 %v182
  %431 = vmatprep.subr.bf16.mxu0 0
  %432 = vmatpush1.bf16.msra.mxu0 0
  %433 = vmatprep.subr.bf16.mxu0 0
  %434 = vmatpush1.bf16.msra.mxu0 0
  %435 = vmatprep.subr.bf16.mxu0 0
  %436 = vmatpush1.bf16.msra.mxu0 0
  %437 = vmatprep.subr.bf16.mxu0 0
  %438 = vmatpush1.bf16.msra.mxu0 0
  %439 = vmatprep.subr.bf16.mxu0 0
  %440 = vmatpush1.bf16.msra.mxu0 0
  %441 = vmatprep.subr.bf16.mxu0 0
  %442 = vmatpush1.bf16.msra.mxu0 0
  %443 = vmatprep.subr.bf16.mxu0 0
  %444 = vmatpush1.bf16.msra.mxu0 0
  %445 = vmatprep.subr.bf16.mxu0 0
  %446 = vmatpush1.bf16.msra.mxu0 0
  %447 = vmatprep.mubr.bf16.mxu0 0
  %448 = vmatmul.mubr.bf16.gmra.mrb[0].mxu0 %v371
  %v449 = vpop.f32.mrb[0].mxu0
  %v450 = vadd.f32 0.0, %v449
  %v451 = vpop.f32.mrb[0].mxu0
  %v452 = vadd.f32 0.0, %v451
  %v453 = vpop.f32.mrb[0].mxu0
  %v454 = vadd.f32 0.0, %v453
  %v455 = vpop.f32.mrb[0].mxu0
  %v456 = vadd.f32 0.0, %v455
  %457 = vdwg.mxu0
  %v458 = vadd.f32 %v363, %v407
  %v459 = vadd.f32 %v364, %v409
  %v460 = vadd.f32 %v365, %v450
  %v461 = vadd.f32 %v366, %v452
  %v462 = vadd.f32 %v367, %v411
  %v463 = vadd.f32 %v368, %v413
  %v464 = vadd.f32 %v369, %v454
  %v465 = vadd.f32 %v370, %v456
  %v466 = vxor.u32 %v458, 2147483648
  %v467 = vxor.u32 %v462, 2147483648
  %v468 = vmul.f32 %v466, 1.442695
  %v469 = vpow.pop %v468
  %v470 = vmul.f32 %v467, 1.442695
  %v471 = vpow.pop %v470
  %v472 = vadd.f32 %v469, 1.0
  %v473 = vadd.f32 %v471, 1.0
  %v474 = vrcp.pop %v472
  %v475 = vmul.f32 1.0, %v474
  %v476 = vrcp.pop %v473
  %v477 = vmul.f32 1.0, %v476
  %v478 = vxor.u32 %v459, 2147483648
  %v479 = vxor.u32 %v463, 2147483648
  %v480 = vmul.f32 %v478, 1.442695
  %v481 = vpow.pop %v480
  %v482 = vmul.f32 %v479, 1.442695
  %v483 = vpow.pop %v482
  %v484 = vadd.f32 %v481, 1.0
  %v485 = vadd.f32 %v483, 1.0
  %v486 = vrcp.pop %v484
  %v487 = vmul.f32 1.0, %v486
  %v488 = vrcp.pop %v485
  %v489 = vmul.f32 1.0, %v488
  %v490 = vtanh.pop %v460
  %v491 = vtanh.pop %v464
  %v492 = vxor.u32 %v461, 2147483648
  %v493 = vxor.u32 %v465, 2147483648
  %v494 = vmul.f32 %v492, 1.442695
  %v495 = vpow.pop %v494
  %v496 = vmul.f32 %v493, 1.442695
  %v497 = vpow.pop %v496
  %v498 = vadd.f32 %v495, 1.0
  %v499 = vadd.f32 %v497, 1.0
  %v500 = vrcp.pop %v498
  %v501 = vmul.f32 1.0, %v500
  %v502 = vrcp.pop %v499
  %v503 = vmul.f32 1.0, %v502
  %v504 = vmul.f32 %v487, %v352
  %v505 = vmul.f32 %v489, %v353
  %v506 = vmul.f32 %v475, %v490
  %v507 = vmul.f32 %v477, %v491
  %v508 = vadd.f32 %v504, %v506
  %v509 = vadd.f32 %v505, %v507
  %v510 = vtanh.pop %v508
  %v511 = vtanh.pop %v509
  %v512 = vmul.f32 %v501, %v510
  %v513 = vmul.f32 %v503, %v511
  %s514 = scalar_lea.vmem %s0, 64
  %v515 = vld [vmem:[%s514] sm:$0xff]
  %v516 = vld [vmem:[%s514 + $0x8] sm:$0xff]
  %v517 = vld [vmem:[%s514 + $0x10] sm:$0xff]
  %v518 = vld [vmem:[%s514 + $0x18] sm:$0xff]
  %v519 = vunpack.c.l.bf16 %v515
  %v520 = vunpack.c.h.bf16 %v515
  %v521 = vunpack.c.l.bf16 %v516
  %v522 = vunpack.c.h.bf16 %v516
  %v523 = vunpack.c.l.bf16 %v517
  %v524 = vunpack.c.h.bf16 %v517
  %v525 = vunpack.c.l.bf16 %v518
  %v526 = vunpack.c.h.bf16 %v518
  %v527 = vpack.c.bf16 %v513, %v512
  %528 = vmatprep.subr.bf16.mxu0 %v153
  %529 = vmatpush1.bf16.msra.mxu0 %v152
  %530 = vmatprep.subr.bf16.mxu0 %v157
  %531 = vmatpush1.bf16.msra.mxu0 %v156
  %532 = vmatprep.subr.bf16.mxu0 %v161
  %533 = vmatpush1.bf16.msra.mxu0 %v160
  %534 = vmatprep.subr.bf16.mxu0 %v165
  %535 = vmatpush1.bf16.msra.mxu0 %v164
  %536 = vmatprep.subr.bf16.mxu0 %v169
  %537 = vmatpush1.bf16.msra.mxu0 %v168
  %538 = vmatprep.subr.bf16.mxu0 %v173
  %539 = vmatpush1.bf16.msra.mxu0 %v172
  %540 = vmatprep.subr.bf16.mxu0 %v177
  %541 = vmatpush1.bf16.msra.mxu0 %v176
  %542 = vmatprep.subr.bf16.mxu0 %v181
  %543 = vmatpush1.bf16.msra.mxu0 %v180
  %544 = vmatprep.subr.bf16.mxu0 0
  %545 = vmatpush1.bf16.msra.mxu0 0
  %546 = vmatprep.subr.bf16.mxu0 0
  %547 = vmatpush1.bf16.msra.mxu0 0
  %548 = vmatprep.subr.bf16.mxu0 0
  %549 = vmatpush1.bf16.msra.mxu0 0
  %550 = vmatprep.subr.bf16.mxu0 0
  %551 = vmatpush1.bf16.msra.mxu0 0
  %552 = vmatprep.subr.bf16.mxu0 0
  %553 = vmatpush1.bf16.msra.mxu0 0
  %554 = vmatprep.subr.bf16.mxu0 0
  %555 = vmatpush1.bf16.msra.mxu0 0
  %556 = vmatprep.subr.bf16.mxu0 0
  %557 = vmatpush1.bf16.msra.mxu0 0
  %558 = vmatprep.subr.bf16.mxu0 0
  %559 = vmatpush1.bf16.msra.mxu0 0
  %560 = vmatprep.mubr.bf16.mxu0 0
  %561 = vmatmul.mubr.bf16.gmra.mrb[0].mxu0 %v527
  %v562 = vpop.f32.mrb[0].mxu0
  %v563 = vadd.f32 0.0, %v562
  %v564 = vpop.f32.mrb[0].mxu0
  %v565 = vadd.f32 0.0, %v564
  %v566 = vpop.f32.mrb[0].mxu0
  %v567 = vadd.f32 0.0, %v566
  %v568 = vpop.f32.mrb[0].mxu0
  %v569 = vadd.f32 0.0, %v568
  %570 = vdwg.mxu0
  %571 = vmatprep.subr.bf16.mxu0 %v155
  %572 = vmatpush1.bf16.msra.mxu0 %v154
  %573 = vmatprep.subr.bf16.mxu0 %v159
  %574 = vmatpush1.bf16.msra.mxu0 %v158
  %575 = vmatprep.subr.bf16.mxu0 %v163
  %576 = vmatpush1.bf16.msra.mxu0 %v162
  %577 = vmatprep.subr.bf16.mxu0 %v167
  %578 = vmatpush1.bf16.msra.mxu0 %v166
  %579 = vmatprep.subr.bf16.mxu0 %v171
  %580 = vmatpush1.bf16.msra.mxu0 %v170
  %581 = vmatprep.subr.bf16.mxu0 %v175
  %582 = vmatpush1.bf16.msra.mxu0 %v174
  %583 = vmatprep.subr.bf16.mxu0 %v179
  %584 = vmatpush1.bf16.msra.mxu0 %v178
  %585 = vmatprep.subr.bf16.mxu0 %v183
  %586 = vmatpush1.bf16.msra.mxu0 %v182
  %587 = vmatprep.subr.bf16.mxu0 0
  %588 = vmatpush1.bf16.msra.mxu0 0
  %589 = vmatprep.subr.bf16.mxu0 0
  %590 = vmatpush1.bf16.msra.mxu0 0
  %591 = vmatprep.subr.bf16.mxu0 0
  %592 = vmatpush1.bf16.msra.mxu0 0
  %593 = vmatprep.subr.bf16.mxu0 0
  %594 = vmatpush1.bf16.msra.mxu0 0
  %595 = vmatprep.subr.bf16.mxu0 0
  %596 = vmatpush1.bf16.msra.mxu0 0
  %597 = vmatprep.subr.bf16.mxu0 0
  %598 = vmatpush1.bf16.msra.mxu0 0
  %599 = vmatprep.subr.bf16.mxu0 0
  %600 = vmatpush1.bf16.msra.mxu0 0
  %601 = vmatprep.subr.bf16.mxu0 0
  %602 = vmatpush1.bf16.msra.mxu0 0
  %603 = vmatprep.mubr.bf16.mxu0 0
  %604 = vmatmul.mubr.bf16.gmra.mrb[0].mxu0 %v527
  %v605 = vpop.f32.mrb[0].mxu0
  %v606 = vadd.f32 0.0, %v605
  %v607 = vpop.f32.mrb[0].mxu0
  %v608 = vadd.f32 0.0, %v607
  %v609 = vpop.f32.mrb[0].mxu0
  %v610 = vadd.f32 0.0, %v609
  %v611 = vpop.f32.mrb[0].mxu0
  %v612 = vadd.f32 0.0, %v611
  %613 = vdwg.mxu0
  %v614 = vadd.f32 %v519, %v563
  %v615 = vadd.f32 %v520, %v565
  %v616 = vadd.f32 %v521, %v606
  %v617 = vadd.f32 %v522, %v608
  %v618 = vadd.f32 %v523, %v567
  %v619 = vadd.f32 %v524, %v569
  %v620 = vadd.f32 %v525, %v610
  %v621 = vadd.f32 %v526, %v612
  %v622 = vxor.u32 %v614, 2147483648
  %v623 = vxor.u32 %v618, 2147483648
  %v624 = vmul.f32 %v622, 1.442695
  %v625 = vpow.pop %v624
  %v626 = vmul.f32 %v623, 1.442695
  %v627 = vpow.pop %v626
  %v628 = vadd.f32 %v625, 1.0
  %v629 = vadd.f32 %v627, 1.0
  %v630 = vrcp.pop %v628
  %v631 = vmul.f32 1.0, %v630
  %v632 = vrcp.pop %v629
  %v633 = vmul.f32 1.0, %v632
  %v634 = vxor.u32 %v615, 2147483648
  %v635 = vxor.u32 %v619, 2147483648
  %v636 = vmul.f32 %v634, 1.442695
  %v637 = vpow.pop %v636
  %v638 = vmul.f32 %v635, 1.442695
  %v639 = vpow.pop %v638
  %v640 = vadd.f32 %v637, 1.0
  %v641 = vadd.f32 %v639, 1.0
  %v642 = vrcp.pop %v640
  %v643 = vmul.f32 1.0, %v642
  %v644 = vrcp.pop %v641
  %v645 = vmul.f32 1.0, %v644
  %v646 = vtanh.pop %v616
  %v647 = vtanh.pop %v620
  %v648 = vxor.u32 %v617, 2147483648
  %v649 = vxor.u32 %v621, 2147483648
  %v650 = vmul.f32 %v648, 1.442695
  %v651 = vpow.pop %v650
  %v652 = vmul.f32 %v649, 1.442695
  %v653 = vpow.pop %v652
  %v654 = vadd.f32 %v651, 1.0
  %v655 = vadd.f32 %v653, 1.0
  %v656 = vrcp.pop %v654
  %v657 = vmul.f32 1.0, %v656
  %v658 = vrcp.pop %v655
  %v659 = vmul.f32 1.0, %v658
  %v660 = vmul.f32 %v643, %v508
  %v661 = vmul.f32 %v645, %v509
  %v662 = vmul.f32 %v631, %v646
  %v663 = vmul.f32 %v633, %v647
  %v664 = vadd.f32 %v660, %v662
  %v665 = vadd.f32 %v661, %v663
  %v666 = vtanh.pop %v664
  %v667 = vtanh.pop %v665
  %v668 = vmul.f32 %v657, %v666
  %v669 = vmul.f32 %v659, %v667
  %670 = vst [vmem:[%s2] sm:$0xff] %v668
  %671 = vst [vmem:[%s2 + $0x8] sm:$0xff] %v669
  // Predicated region
  $region10: #{gcn_forward.10} parent=0 // pred_check
    _
  $region11: #{gcn_forward.10} parent=0 // pred_check_branch
    %673 = sbr.rel (0) target = $region13
  $region12: #{gcn_forward.10} parent=0 // pred_region
    _
  $region13: #{gcn_forward.10} parent=0 // pred_fallthru
    _
  // Predicated region
  $region14: #{gcn_forward.10} parent=0 // pred_check
    _
  $region15: #{gcn_forward.10} parent=0 // pred_check_branch
    %675 = sbr.rel (0) target = $region17
  $region16: #{gcn_forward.10} parent=0 // pred_region
    _
  $region17: #{gcn_forward.10} parent=0 // pred_fallthru
    _

// kernel: gcn_forward.15
$region0: #{gcn_forward.15}
  #allocation0 [shape = 'u32[]', space=smem, size = 0x4, offset = 0x4, fixed_abs, tag = 'smem constant byte address 0x4 - core index']
  #allocation1 [shape = 'u32[144,128]{1,0:T(1,128)}', space=vmem, size = 0x12000, scoped, tag = 'internal scratch']
  %s0 = inlined_call_operand.vmem [shape: f32[16,128], index: 0, kind: input, shape index: {}]
  %s1 = inlined_call_operand.vmem [shape: f32[16,128], index: 1, kind: input, shape index: {}]
  %s2 = inlined_call_operand.vmem [shape: bf16[128,128], index: 2, kind: input, shape index: {}]
  %s3 = inlined_call_operand.vmem [shape: bf16[128,128], index: 3, kind: input, shape index: {}]
  %s4 = inlined_call_operand.vmem [shape: f32[1,128], index: 4, kind: input, shape index: {}]
  %s5 = inlined_call_operand.vmem [shape: bf16[128,128], index: 5, kind: input, shape index: {}]
  %s6 = inlined_call_operand.vmem [shape: f32[1,128], index: 6, kind: input, shape index: {}]
  %s7 = inlined_call_operand.vmem [shape: bf16[128,128], index: 7, kind: input, shape index: {}]
  %s8 = inlined_call_operand.vmem [shape: f32[1,128], index: 8, kind: input, shape index: {}]
  %s9 = inlined_call_operand.vmem [shape: bf16[128,128], index: 9, kind: input, shape index: {}]
  %s10 = inlined_call_operand.vmem [shape: f32[1,128], index: 10, kind: input, shape index: {}]
  %s11 = inlined_call_operand.hbm [shape: f32[16,128], index: 11, kind: output, shape index: {}]
  %s12 = sld [smem:[#allocation0]]
  $region54: #{gcn_forward.15} parent=0
    _
  %s14 = ssub.s32 1, %s12
  %s15 = scalar_select 0, %s14, %s12
  $region1: #{gcn_forward.15} parent=0
    #allocation2 [shape = 'u8[8192]{0}', space=vmem, size = 0x2000, scoped, tag = 'output window, operand 0, single buffered']
    #allocation3 [shape = 's32[1]{0}', space=sflag, size = 0x4, scoped, tag = 'scoped memory for gcn_forward.15']
    %16 = vsyncpa [#allocation3], 0
    // Predicated region
    $region2: #{gcn_forward.15} parent=1 // pred_check
      _
    $region3: #{gcn_forward.15} parent=1 // pred_check_branch
      %18 = sbr.rel (0) target = $region5
    $region4: #{gcn_forward.15} parent=1 // pred_region
      _
    $region5: #{gcn_forward.15} parent=1 // pred_fallthru
      _
    // Predicated region
    $region6: #{gcn_forward.15} parent=1 // pred_check
      _
    $region7: #{gcn_forward.15} parent=1 // pred_check_branch
      %20 = sbr.rel (0) target = $region9
    $region8: #{gcn_forward.15} parent=1 // pred_region
      _
    $region9: #{gcn_forward.15} parent=1 // pred_fallthru
      _
    // Predicated region
    $region10: #{gcn_forward.15} parent=1 // pred_check
      _
    $region11: #{gcn_forward.15} parent=1 // pred_check_branch
      %22 = sbr.rel (0) target = $region13
    $region12: #{gcn_forward.15} parent=1 // pred_region
      _
    $region13: #{gcn_forward.15} parent=1 // pred_fallthru
      _
    // Predicated region
    $region14: #{gcn_forward.15} parent=1 // pred_check
      _
    $region15: #{gcn_forward.15} parent=1 // pred_check_branch
      %24 = sbr.rel (0) target = $region17
    $region16: #{gcn_forward.15} parent=1 // pred_region
      _
    $region17: #{gcn_forward.15} parent=1 // pred_fallthru
      _
    // Predicated region
    $region18: #{gcn_forward.15} parent=1 // pred_check
      _
    $region19: #{gcn_forward.15} parent=1 // pred_check_branch
      %26 = sbr.rel (0) target = $region21
    $region20: #{gcn_forward.15} parent=1 // pred_region
      _
    $region21: #{gcn_forward.15} parent=1 // pred_fallthru
      _
    // Predicated region
    $region22: #{gcn_forward.15} parent=1 // pred_check
      _
    $region23: #{gcn_forward.15} parent=1 // pred_check_branch
      %28 = sbr.rel (0) target = $region25
    $region24: #{gcn_forward.15} parent=1 // pred_region
      _
    $region25: #{gcn_forward.15} parent=1 // pred_fallthru
      _
    // Predicated region
    $region26: #{gcn_forward.15} parent=1 // pred_check
      _
    $region27: #{gcn_forward.15} parent=1 // pred_check_branch
      %30 = sbr.rel (0) target = $region29
    $region28: #{gcn_forward.15} parent=1 // pred_region
      _
    $region29: #{gcn_forward.15} parent=1 // pred_fallthru
      _
    // Predicated region
    $region30: #{gcn_forward.15} parent=1 // pred_check
      _
    $region31: #{gcn_forward.15} parent=1 // pred_check_branch
      %32 = sbr.rel (0) target = $region33
    $region32: #{gcn_forward.15} parent=1 // pred_region
      _
    $region33: #{gcn_forward.15} parent=1 // pred_fallthru
      _
    // Predicated region
    $region34: #{gcn_forward.15} parent=1 // pred_check
      _
    $region35: #{gcn_forward.15} parent=1 // pred_check_branch
      %34 = sbr.rel (0) target = $region37
    $region36: #{gcn_forward.15} parent=1 // pred_region
      _
    $region37: #{gcn_forward.15} parent=1 // pred_fallthru
      _
    // Predicated region
    $region38: #{gcn_forward.15} parent=1 // pred_check
      _
    $region39: #{gcn_forward.15} parent=1 // pred_check_branch
      %36 = sbr.rel (0) target = $region41
    $region40: #{gcn_forward.15} parent=1 // pred_region
      _
    $region41: #{gcn_forward.15} parent=1 // pred_fallthru
      _
    // Predicated region
    $region42: #{gcn_forward.15} parent=1 // pred_check
      _
    $region43: #{gcn_forward.15} parent=1 // pred_check_branch
      %38 = sbr.rel (0) target = $region45
    $region44: #{gcn_forward.15} parent=1 // pred_region
      _
    $region45: #{gcn_forward.15} parent=1 // pred_fallthru
      _
    %v40 = vld [vmem:[%s0] sm:$0xff]
    %v41 = vld [vmem:[%s0 + $0x8] sm:$0xff]
    %v42 = vpack.c.bf16 %v41, %v40
    %v43 = vld [vmem:[%s2] sm:$0xf]
    %v44 = vld [vmem:[%s2 + $0x4] sm:$0xf]
    %v45 = vld [vmem:[%s2 + $0x8] sm:$0xf]
    %v46 = vld [vmem:[%s2 + $0xc] sm:$0xf]
    %v47 = vld [vmem:[%s2 + $0x10] sm:$0xf]
    %v48 = vld [vmem:[%s2 + $0x14] sm:$0xf]
    %v49 = vld [vmem:[%s2 + $0x18] sm:$0xf]
    %v50 = vld [vmem:[%s2 + $0x1c] sm:$0xf]
    %v51 = vld [vmem:[%s2 + $0x20] sm:$0xf]
    %v52 = vld [vmem:[%s2 + $0x24] sm:$0xf]
    %v53 = vld [vmem:[%s2 + $0x28] sm:$0xf]
    %v54 = vld [vmem:[%s2 + $0x2c] sm:$0xf]
    %v55 = vld [vmem:[%s2 + $0x30] sm:$0xf]
    %v56 = vld [vmem:[%s2 + $0x34] sm:$0xf]
    %v57 = vld [vmem:[%s2 + $0x38] sm:$0xf]
    %v58 = vld [vmem:[%s2 + $0x3c] sm:$0xf]
    %v59 = vld [vmem:[%s1] sm:$0xff]
    %v60 = vld [vmem:[%s1 + $0x8] sm:$0xff]
    %v61 = vpack.c.bf16 %v60, %v59
    %v62 = vld [vmem:[%s3] sm:$0xf]
    %v63 = vld [vmem:[%s3 + $0x4] sm:$0xf]
    %v64 = vld [vmem:[%s3 + $0x8] sm:$0xf]
    %v65 = vld [vmem:[%s3 + $0xc] sm:$0xf]
    %v66 = vld [vmem:[%s3 + $0x10] sm:$0xf]
    %v67 = vld [vmem:[%s3 + $0x14] sm:$0xf]
    %v68 = vld [vmem:[%s3 + $0x18] sm:$0xf]
    %v69 = vld [vmem:[%s3 + $0x1c] sm:$0xf]
    %v70 = vld [vmem:[%s3 + $0x20] sm:$0xf]
    %v71 = vld [vmem:[%s3 + $0x24] sm:$0xf]
    %v72 = vld [vmem:[%s3 + $0x28] sm:$0xf]
    %v73 = vld [vmem:[%s3 + $0x2c] sm:$0xf]
    %v74 = vld [vmem:[%s3 + $0x30] sm:$0xf]
    %v75 = vld [vmem:[%s3 + $0x34] sm:$0xf]
    %v76 = vld [vmem:[%s3 + $0x38] sm:$0xf]
    %v77 = vld [vmem:[%s3 + $0x3c] sm:$0xf]
    %v94 = vunpack.c.l.b16 %v62
    %v95 = vunpack.c.l.b16 %v63
    %v96 = vunpack.c.l.b16 %v64
    %v97 = vunpack.c.l.b16 %v65
    %v98 = vunpack.c.l.b16 %v66
    %v99 = vunpack.c.l.b16 %v67
    %v100 = vunpack.c.l.b16 %v68
    %v101 = vunpack.c.l.b16 %v69
    %v102 = vunpack.c.l.b16 %v70
    %v103 = vunpack.c.l.b16 %v71
    %v104 = vunpack.c.l.b16 %v72
    %v105 = vunpack.c.l.b16 %v73
    %v106 = vunpack.c.l.b16 %v74
    %v107 = vunpack.c.l.b16 %v75
    %v108 = vunpack.c.l.b16 %v76
    %v109 = vunpack.c.l.b16 %v77
    %v110 = vpack.c.b16 %v95, %v94
    %v111 = vpack.c.b16 %v97, %v96
    %v112 = vpack.c.b16 %v99, %v98
    %v113 = vpack.c.b16 %v101, %v100
    %v114 = vpack.c.b16 %v103, %v102
    %v115 = vpack.c.b16 %v105, %v104
    %v116 = vpack.c.b16 %v107, %v106
    %v117 = vpack.c.b16 %v109, %v108
    %126 = vmatprep.subr.bf16.mxu0 0
    %127 = vmatpush1.bf16.msra.mxu0 %v110
    %128 = vmatprep.subr.bf16.mxu0 0
    %129 = vmatpush1.bf16.msra.mxu0 %v111
    %130 = vmatprep.subr.bf16.mxu0 0
    %131 = vmatpush1.bf16.msra.mxu0 %v112
    %132 = vmatprep.subr.bf16.mxu0 0
    %133 = vmatpush1.bf16.msra.mxu0 %v113
    %134 = vmatprep.subr.bf16.mxu0 0
    %135 = vmatpush1.bf16.msra.mxu0 %v114
    %136 = vmatprep.subr.bf16.mxu0 0
    %137 = vmatpush1.bf16.msra.mxu0 %v115
    %138 = vmatprep.subr.bf16.mxu0 0
    %139 = vmatpush1.bf16.msra.mxu0 %v116
    %140 = vmatprep.subr.bf16.mxu0 0
    %141 = vmatpush1.bf16.msra.mxu0 %v117
    %142 = vmatprep.subr.bf16.mxu0 0
    %143 = vmatpush1.bf16.msra.mxu0 0
    %144 = vmatprep.subr.bf16.mxu0 0
    %145 = vmatpush1.bf16.msra.mxu0 0
    %146 = vmatprep.subr.bf16.mxu0 0
    %147 = vmatpush1.bf16.msra.mxu0 0
    %148 = vmatprep.subr.bf16.mxu0 0
    %149 = vmatpush1.bf16.msra.mxu0 0
    %150 = vmatprep.subr.bf16.mxu0 0
    %151 = vmatpush1.bf16.msra.mxu0 0
    %152 = vmatprep.subr.bf16.mxu0 0
    %153 = vmatpush1.bf16.msra.mxu0 0
    %154 = vmatprep.subr.bf16.mxu0 0
    %155 = vmatpush1.bf16.msra.mxu0 0
    %156 = vmatprep.subr.bf16.mxu0 0
    %157 = vmatpush1.bf16.msra.mxu0 0
    %158 = vmatprep.mubr.bf16.mxu0 0
    %159 = vmatmul.mubr.bf16.gmra.mrb[0].mxu0 %v61
    %v160 = vpop.f32.mrb[0].mxu0
    %v161 = vadd.f32 0.0, %v160
    %v162 = vpop.f32.mrb[0].mxu0
    %v163 = vpop.f32.mrb[0].mxu0
    %v164 = vadd.f32 0.0, %v163
    %v165 = vpop.f32.mrb[0].mxu0
    %166 = vdwg.mxu0
    %v183 = vunpack.c.l.b16 %v43
    %v184 = vunpack.c.l.b16 %v44
    %v185 = vunpack.c.l.b16 %v45
    %v186 = vunpack.c.l.b16 %v46
    %v187 = vunpack.c.l.b16 %v47
    %v188 = vunpack.c.l.b16 %v48
    %v189 = vunpack.c.l.b16 %v49
    %v190 = vunpack.c.l.b16 %v50
    %v191 = vunpack.c.l.b16 %v51
    %v192 = vunpack.c.l.b16 %v52
    %v193 = vunpack.c.l.b16 %v53
    %v194 = vunpack.c.l.b16 %v54
    %v195 = vunpack.c.l.b16 %v55
    %v196 = vunpack.c.l.b16 %v56
    %v197 = vunpack.c.l.b16 %v57
    %v198 = vunpack.c.l.b16 %v58
    %v199 = vpack.c.b16 %v184, %v183
    %v200 = vpack.c.b16 %v186, %v185
    %v201 = vpack.c.b16 %v188, %v187
    %v202 = vpack.c.b16 %v190, %v189
    %v203 = vpack.c.b16 %v192, %v191
    %v204 = vpack.c.b16 %v194, %v193
    %v205 = vpack.c.b16 %v196, %v195
    %v206 = vpack.c.b16 %v198, %v197
    %215 = vmatprep.subr.bf16.mxu0 0
    %216 = vmatpush1.bf16.msra.mxu0 %v199
    %217 = vmatprep.subr.bf16.mxu0 0
    %218 = vmatpush1.bf16.msra.mxu0 %v200
    %219 = vmatprep.subr.bf16.mxu0 0
    %220 = vmatpush1.bf16.msra.mxu0 %v201
    %221 = vmatprep.subr.bf16.mxu0 0
    %222 = vmatpush1.bf16.msra.mxu0 %v202
    %223 = vmatprep.subr.bf16.mxu0 0
    %224 = vmatpush1.bf16.msra.mxu0 %v203
    %225 = vmatprep.subr.bf16.mxu0 0
    %226 = vmatpush1.bf16.msra.mxu0 %v204
    %227 = vmatprep.subr.bf16.mxu0 0
    %228 = vmatpush1.bf16.msra.mxu0 %v205
    %229 = vmatprep.subr.bf16.mxu0 0
    %230 = vmatpush1.bf16.msra.mxu0 %v206
    %231 = vmatprep.subr.bf16.mxu0 0
    %232 = vmatpush1.bf16.msra.mxu0 0
    %233 = vmatprep.subr.bf16.mxu0 0
    %234 = vmatpush1.bf16.msra.mxu0 0
    %235 = vmatprep.subr.bf16.mxu0 0
    %236 = vmatpush1.bf16.msra.mxu0 0
    %237 = vmatprep.subr.bf16.mxu0 0
    %238 = vmatpush1.bf16.msra.mxu0 0
    %239 = vmatprep.subr.bf16.mxu0 0
    %240 = vmatpush1.bf16.msra.mxu0 0
    %241 = vmatprep.subr.bf16.mxu0 0
    %242 = vmatpush1.bf16.msra.mxu0 0
    %243 = vmatprep.subr.bf16.mxu0 0
    %244 = vmatpush1.bf16.msra.mxu0 0
    %245 = vmatprep.subr.bf16.mxu0 0
    %246 = vmatpush1.bf16.msra.mxu0 0
    %247 = vmatprep.mubr.bf16.mxu0 0
    %248 = vmatmul.mubr.bf16.gmra.mrb[0].mxu0 %v42
    %v249 = vpop.f32.mrb[0].mxu0
    %v250 = vadd.f32 %v161, %v249
    %v251 = vpop.f32.mrb[0].mxu0
    %v252 = vpop.f32.mrb[0].mxu0
    %v253 = vadd.f32 %v164, %v252
    %v254 = vpop.f32.mrb[0].mxu0
    %255 = vdwg.mxu0
    %v256 = vld [vmem:[%s4] sm:$0x1]
    %v258 = vlaneseq
    %v259 = vshrl.u32 %v258, 7
    %v260 = vsub.s32 0, %v259
    %v261 = vrot.slane %v256, %v260
    %v263 = vadd.f32 %v250, %v261
    %v264 = vadd.f32 %v253, %v261
    %v265 = vmax.f32 %v263, 0.0
    %v266 = vmax.f32 %v264, 0.0
    %v267 = vpack.c.bf16 %v266, %v265
    %v268 = vld [vmem:[%s5] sm:$0xf]
    %v269 = vld [vmem:[%s5 + $0x4] sm:$0xf]
    %v270 = vld [vmem:[%s5 + $0x8] sm:$0xf]
    %v271 = vld [vmem:[%s5 + $0xc] sm:$0xf]
    %v272 = vld [vmem:[%s5 + $0x10] sm:$0xf]
    %v273 = vld [vmem:[%s5 + $0x14] sm:$0xf]
    %v274 = vld [vmem:[%s5 + $0x18] sm:$0xf]
    %v275 = vld [vmem:[%s5 + $0x1c] sm:$0xf]
    %v276 = vld [vmem:[%s5 + $0x20] sm:$0xf]
    %v277 = vld [vmem:[%s5 + $0x24] sm:$0xf]
    %v278 = vld [vmem:[%s5 + $0x28] sm:$0xf]
    %v279 = vld [vmem:[%s5 + $0x2c] sm:$0xf]
    %v280 = vld [vmem:[%s5 + $0x30] sm:$0xf]
    %v281 = vld [vmem:[%s5 + $0x34] sm:$0xf]
    %v282 = vld [vmem:[%s5 + $0x38] sm:$0xf]
    %v283 = vld [vmem:[%s5 + $0x3c] sm:$0xf]
    %v284 = vld [vmem:[%s6] sm:$0x1]
    %v286 = vlaneseq
    %v287 = vshrl.u32 %v286, 7
    %v288 = vsub.s32 0, %v287
    %v289 = vrot.slane %v284, %v288
    %v307 = vunpack.c.l.b16 %v268
    %v308 = vunpack.c.l.b16 %v269
    %v309 = vunpack.c.l.b16 %v270
    %v310 = vunpack.c.l.b16 %v271
    %v311 = vunpack.c.l.b16 %v272
    %v312 = vunpack.c.l.b16 %v273
    %v313 = vunpack.c.l.b16 %v274
    %v314 = vunpack.c.l.b16 %v275
    %v315 = vunpack.c.l.b16 %v276
    %v316 = vunpack.c.l.b16 %v277
    %v317 = vunpack.c.l.b16 %v278
    %v318 = vunpack.c.l.b16 %v279
    %v319 = vunpack.c.l.b16 %v280
    %v320 = vunpack.c.l.b16 %v281
    %v321 = vunpack.c.l.b16 %v282
    %v322 = vunpack.c.l.b16 %v283
    %v323 = vpack.c.b16 %v308, %v307
    %v324 = vpack.c.b16 %v310, %v309
    %v325 = vpack.c.b16 %v312, %v311
    %v326 = vpack.c.b16 %v314, %v313
    %v327 = vpack.c.b16 %v316, %v315
    %v328 = vpack.c.b16 %v318, %v317
    %v329 = vpack.c.b16 %v320, %v319
    %v330 = vpack.c.b16 %v322, %v321
    %339 = vmatprep.subr.bf16.mxu0 0
    %340 = vmatpush1.bf16.msra.mxu0 %v323
    %341 = vmatprep.subr.bf16.mxu0 0
    %342 = vmatpush1.bf16.msra.mxu0 %v324
    %343 = vmatprep.subr.bf16.mxu0 0
    %344 = vmatpush1.bf16.msra.mxu0 %v325
    %345 = vmatprep.subr.bf16.mxu0 0
    %346 = vmatpush1.bf16.msra.mxu0 %v326
    %347 = vmatprep.subr.bf16.mxu0 0
    %348 = vmatpush1.bf16.msra.mxu0 %v327
    %349 = vmatprep.subr.bf16.mxu0 0
    %350 = vmatpush1.bf16.msra.mxu0 %v328
    %351 = vmatprep.subr.bf16.mxu0 0
    %352 = vmatpush1.bf16.msra.mxu0 %v329
    %353 = vmatprep.subr.bf16.mxu0 0
    %354 = vmatpush1.bf16.msra.mxu0 %v330
    %355 = vmatprep.subr.bf16.mxu0 0
    %356 = vmatpush1.bf16.msra.mxu0 0
    %357 = vmatprep.subr.bf16.mxu0 0
    %358 = vmatpush1.bf16.msra.mxu0 0
    %359 = vmatprep.subr.bf16.mxu0 0
    %360 = vmatpush1.bf16.msra.mxu0 0
    %361 = vmatprep.subr.bf16.mxu0 0
    %362 = vmatpush1.bf16.msra.mxu0 0
    %363 = vmatprep.subr.bf16.mxu0 0
    %364 = vmatpush1.bf16.msra.mxu0 0
    %365 = vmatprep.subr.bf16.mxu0 0
    %366 = vmatpush1.bf16.msra.mxu0 0
    %367 = vmatprep.subr.bf16.mxu0 0
    %368 = vmatpush1.bf16.msra.mxu0 0
    %369 = vmatprep.subr.bf16.mxu0 0
    %370 = vmatpush1.bf16.msra.mxu0 0
    %371 = vmatprep.mubr.bf16.mxu0 0
    %372 = vmatmul.mubr.bf16.gmra.mrb[0].mxu0 %v267
    %v373 = vpop.f32.mrb[0].mxu0
    %v374 = vadd.f32 %v289, %v373
    %v375 = vpop.f32.mrb[0].mxu0
    %v376 = vpop.f32.mrb[0].mxu0
    %v377 = vadd.f32 %v289, %v376
    %v378 = vpop.f32.mrb[0].mxu0
    %379 = vdwg.mxu0
    %v380 = vmax.f32 %v374, 0.0
    %v381 = vmax.f32 %v377, 0.0
    %v382 = vpack.c.bf16 %v381, %v380
    %v383 = vld [vmem:[%s7] sm:$0xf]
    %v384 = vld [vmem:[%s7 + $0x4] sm:$0xf]
    %v385 = vld [vmem:[%s7 + $0x8] sm:$0xf]
    %v386 = vld [vmem:[%s7 + $0xc] sm:$0xf]
    %v387 = vld [vmem:[%s7 + $0x10] sm:$0xf]
    %v388 = vld [vmem:[%s7 + $0x14] sm:$0xf]
    %v389 = vld [vmem:[%s7 + $0x18] sm:$0xf]
    %v390 = vld [vmem:[%s7 + $0x1c] sm:$0xf]
    %v391 = vld [vmem:[%s7 + $0x20] sm:$0xf]
    %v392 = vld [vmem:[%s7 + $0x24] sm:$0xf]
    %v393 = vld [vmem:[%s7 + $0x28] sm:$0xf]
    %v394 = vld [vmem:[%s7 + $0x2c] sm:$0xf]
    %v395 = vld [vmem:[%s7 + $0x30] sm:$0xf]
    %v396 = vld [vmem:[%s7 + $0x34] sm:$0xf]
    %v397 = vld [vmem:[%s7 + $0x38] sm:$0xf]
    %v398 = vld [vmem:[%s7 + $0x3c] sm:$0xf]
    %v399 = vld [vmem:[%s8] sm:$0x1]
    %v401 = vlaneseq
    %v402 = vshrl.u32 %v401, 7
    %v403 = vsub.s32 0, %v402
    %v404 = vrot.slane %v399, %v403
    %v422 = vunpack.c.l.b16 %v383
    %v423 = vunpack.c.l.b16 %v384
    %v424 = vunpack.c.l.b16 %v385
    %v425 = vunpack.c.l.b16 %v386
    %v426 = vunpack.c.l.b16 %v387
    %v427 = vunpack.c.l.b16 %v388
    %v428 = vunpack.c.l.b16 %v389
    %v429 = vunpack.c.l.b16 %v390
    %v430 = vunpack.c.l.b16 %v391
    %v431 = vunpack.c.l.b16 %v392
    %v432 = vunpack.c.l.b16 %v393
    %v433 = vunpack.c.l.b16 %v394
    %v434 = vunpack.c.l.b16 %v395
    %v435 = vunpack.c.l.b16 %v396
    %v436 = vunpack.c.l.b16 %v397
    %v437 = vunpack.c.l.b16 %v398
    %v438 = vpack.c.b16 %v423, %v422
    %v439 = vpack.c.b16 %v425, %v424
    %v440 = vpack.c.b16 %v427, %v426
    %v441 = vpack.c.b16 %v429, %v428
    %v442 = vpack.c.b16 %v431, %v430
    %v443 = vpack.c.b16 %v433, %v432
    %v444 = vpack.c.b16 %v435, %v434
    %v445 = vpack.c.b16 %v437, %v436
    %454 = vmatprep.subr.bf16.mxu0 0
    %455 = vmatpush1.bf16.msra.mxu0 %v438
    %456 = vmatprep.subr.bf16.mxu0 0
    %457 = vmatpush1.bf16.msra.mxu0 %v439
    %458 = vmatprep.subr.bf16.mxu0 0
    %459 = vmatpush1.bf16.msra.mxu0 %v440
    %460 = vmatprep.subr.bf16.mxu0 0
    %461 = vmatpush1.bf16.msra.mxu0 %v441
    %462 = vmatprep.subr.bf16.mxu0 0
    %463 = vmatpush1.bf16.msra.mxu0 %v442
    %464 = vmatprep.subr.bf16.mxu0 0
    %465 = vmatpush1.bf16.msra.mxu0 %v443
    %466 = vmatprep.subr.bf16.mxu0 0
    %467 = vmatpush1.bf16.msra.mxu0 %v444
    %468 = vmatprep.subr.bf16.mxu0 0
    %469 = vmatpush1.bf16.msra.mxu0 %v445
    %470 = vmatprep.subr.bf16.mxu0 0
    %471 = vmatpush1.bf16.msra.mxu0 0
    %472 = vmatprep.subr.bf16.mxu0 0
    %473 = vmatpush1.bf16.msra.mxu0 0
    %474 = vmatprep.subr.bf16.mxu0 0
    %475 = vmatpush1.bf16.msra.mxu0 0
    %476 = vmatprep.subr.bf16.mxu0 0
    %477 = vmatpush1.bf16.msra.mxu0 0
    %478 = vmatprep.subr.bf16.mxu0 0
    %479 = vmatpush1.bf16.msra.mxu0 0
    %480 = vmatprep.subr.bf16.mxu0 0
    %481 = vmatpush1.bf16.msra.mxu0 0
    %482 = vmatprep.subr.bf16.mxu0 0
    %483 = vmatpush1.bf16.msra.mxu0 0
    %484 = vmatprep.subr.bf16.mxu0 0
    %485 = vmatpush1.bf16.msra.mxu0 0
    %486 = vmatprep.mubr.bf16.mxu0 0
    %487 = vmatmul.mubr.bf16.gmra.mrb[0].mxu0 %v382
    %v488 = vpop.f32.mrb[0].mxu0
    %v489 = vadd.f32 %v404, %v488
    %v490 = vpop.f32.mrb[0].mxu0
    %v491 = vpop.f32.mrb[0].mxu0
    %v492 = vadd.f32 %v404, %v491
    %v493 = vpop.f32.mrb[0].mxu0
    %494 = vdwg.mxu0
    %v495 = vmax.f32 %v489, 0.0
    %v496 = vmax.f32 %v492, 0.0
    %v497 = vpack.c.bf16 %v496, %v495
    %v498 = vld [vmem:[%s9] sm:$0xf]
    %v499 = vld [vmem:[%s9 + $0x4] sm:$0xf]
    %v500 = vld [vmem:[%s9 + $0x8] sm:$0xf]
    %v501 = vld [vmem:[%s9 + $0xc] sm:$0xf]
    %v502 = vld [vmem:[%s9 + $0x10] sm:$0xf]
    %v503 = vld [vmem:[%s9 + $0x14] sm:$0xf]
    %v504 = vld [vmem:[%s9 + $0x18] sm:$0xf]
    %v505 = vld [vmem:[%s9 + $0x1c] sm:$0xf]
    %v506 = vld [vmem:[%s9 + $0x20] sm:$0xf]
    %v507 = vld [vmem:[%s9 + $0x24] sm:$0xf]
    %v508 = vld [vmem:[%s9 + $0x28] sm:$0xf]
    %v509 = vld [vmem:[%s9 + $0x2c] sm:$0xf]
    %v510 = vld [vmem:[%s9 + $0x30] sm:$0xf]
    %v511 = vld [vmem:[%s9 + $0x34] sm:$0xf]
    %v512 = vld [vmem:[%s9 + $0x38] sm:$0xf]
    %v513 = vld [vmem:[%s9 + $0x3c] sm:$0xf]
    %v514 = vld [vmem:[%s10] sm:$0x1]
    %v516 = vlaneseq
    %v517 = vshrl.u32 %v516, 7
    %v518 = vsub.s32 0, %v517
    %v519 = vrot.slane %v514, %v518
    %v537 = vunpack.c.l.b16 %v498
    %v538 = vunpack.c.l.b16 %v499
    %v539 = vunpack.c.l.b16 %v500
    %v540 = vunpack.c.l.b16 %v501
    %v541 = vunpack.c.l.b16 %v502
    %v542 = vunpack.c.l.b16 %v503
    %v543 = vunpack.c.l.b16 %v504
    %v544 = vunpack.c.l.b16 %v505
    %v545 = vunpack.c.l.b16 %v506
    %v546 = vunpack.c.l.b16 %v507
    %v547 = vunpack.c.l.b16 %v508
    %v548 = vunpack.c.l.b16 %v509
    %v549 = vunpack.c.l.b16 %v510
    %v550 = vunpack.c.l.b16 %v511
    %v551 = vunpack.c.l.b16 %v512
    %v552 = vunpack.c.l.b16 %v513
    %v553 = vpack.c.b16 %v538, %v537
    %v554 = vpack.c.b16 %v540, %v539
    %v555 = vpack.c.b16 %v542, %v541
    %v556 = vpack.c.b16 %v544, %v543
    %v557 = vpack.c.b16 %v546, %v545
    %v558 = vpack.c.b16 %v548, %v547
    %v559 = vpack.c.b16 %v550, %v549
    %v560 = vpack.c.b16 %v552, %v551
    %569 = vmatprep.subr.bf16.mxu0 0
    %570 = vmatpush1.bf16.msra.mxu0 %v553
    %571 = vmatprep.subr.bf16.mxu0 0
    %572 = vmatpush1.bf16.msra.mxu0 %v554
    %573 = vmatprep.subr.bf16.mxu0 0
    %574 = vmatpush1.bf16.msra.mxu0 %v555
    %575 = vmatprep.subr.bf16.mxu0 0
    %576 = vmatpush1.bf16.msra.mxu0 %v556
    %577 = vmatprep.subr.bf16.mxu0 0
    %578 = vmatpush1.bf16.msra.mxu0 %v557
    %579 = vmatprep.subr.bf16.mxu0 0
    %580 = vmatpush1.bf16.msra.mxu0 %v558
    %581 = vmatprep.subr.bf16.mxu0 0
    %582 = vmatpush1.bf16.msra.mxu0 %v559
    %583 = vmatprep.subr.bf16.mxu0 0
    %584 = vmatpush1.bf16.msra.mxu0 %v560
    %585 = vmatprep.subr.bf16.mxu0 0
    %586 = vmatpush1.bf16.msra.mxu0 0
    %587 = vmatprep.subr.bf16.mxu0 0
    %588 = vmatpush1.bf16.msra.mxu0 0
    %589 = vmatprep.subr.bf16.mxu0 0
    %590 = vmatpush1.bf16.msra.mxu0 0
    %591 = vmatprep.subr.bf16.mxu0 0
    %592 = vmatpush1.bf16.msra.mxu0 0
    %593 = vmatprep.subr.bf16.mxu0 0
    %594 = vmatpush1.bf16.msra.mxu0 0
    %595 = vmatprep.subr.bf16.mxu0 0
    %596 = vmatpush1.bf16.msra.mxu0 0
    %597 = vmatprep.subr.bf16.mxu0 0
    %598 = vmatpush1.bf16.msra.mxu0 0
    %599 = vmatprep.subr.bf16.mxu0 0
    %600 = vmatpush1.bf16.msra.mxu0 0
    %601 = vmatprep.mubr.bf16.mxu0 0
    %602 = vmatmul.mubr.bf16.gmra.mrb[0].mxu0 %v497
    %v603 = vpop.f32.mrb[0].mxu0
    %v604 = vadd.f32 %v519, %v603
    %v605 = vpop.f32.mrb[0].mxu0
    %v606 = vpop.f32.mrb[0].mxu0
    %v607 = vadd.f32 %v519, %v606
    %v608 = vpop.f32.mrb[0].mxu0
    %609 = vdwg.mxu0
    %v610 = vmax.f32 %v604, 0.0
    %v611 = vmax.f32 %v607, 0.0
    %612 = vst [vmem:[#allocation2] sm:$0xff] %v610
    %613 = vst [vmem:[#allocation2 + $0x8] sm:$0xff] %v611
    // Predicated region
    $region46: #{gcn_forward.15} parent=1 // pred_check
      _
    $region47: #{gcn_forward.15} parent=1 // pred_check_branch
      %615 = sbr.rel (0) target = $region49
    $region48: #{gcn_forward.15} parent=1 // pred_region
      %s617 = ssub.s32 256, 256
      %618 = vsyncadd [#allocation3], %s617
      %s619 = sshll.u32 [#allocation2], 4
      %s620 = int_to_ptr.vmem [resolvable:$true] %s619
      %625 = dma.vmem_to_hbm [thread:$0]  %s620, 256, %s11, [#allocation3], 128, 128, 8
    $region49: #{gcn_forward.15} parent=1 // pred_fallthru
      _
    // Predicated region
    $region50: #{gcn_forward.15} parent=1 // pred_check
      _
    $region51: #{gcn_forward.15} parent=1 // pred_check_branch
      %627 = sbr.rel (0) target = $region53
    $region52: #{gcn_forward.15} parent=1 // pred_region
      %628 = dma.done [#allocation3], 256
    $region53: #{gcn_forward.15} parent=1 // pred_fallthru
      _
    %629 = vsyncpa [#allocation3], 1

</llo_original>
